<compile_context>
chip_gen: v5e
topology: v5e:2x2
jax: 0.10.0
libtpu: 0.0.40
codegen_flags: <defaults>
</compile_context>

<pallas_src>
import functools
from typing import NamedTuple

import jax
import jax.numpy as jnp
from jax.experimental import pallas as pl
from jax.experimental.pallas import tpu as pltpu


def _round_up(x, m):
    return ((x + m - 1) // m) * m


# ----------------------------------------------------------------------------- kernel --
def _mlp_kernel(num_hidden_layers, precision,
                x_ref, w1_ref, b1_ref, wh_ref, bh_ref, wo_ref, bo_ref, o_ref):
    mm_dtype = w1_ref.dtype          # MXU operand dtype (bf16 fast path / f32 exact path)
    ew_dtype = b1_ref.dtype          # elementwise (bias add / ReLU) dtype
    tb = x_ref.shape[0]
    hid_p = bh_ref.shape[1]

    # Layer 1: Linear(input, hidden) + ReLU.  In-kernel operand cast; f32 accumulation.
    x = x_ref[...]
    if x.dtype != mm_dtype:
        x = x.astype(mm_dtype)       # VPU cast, hidden under the MXU slot
    h = jnp.dot(x, w1_ref[...], preferred_element_type=jnp.float32, precision=precision)
    h = jnp.maximum(h.astype(ew_dtype) + b1_ref[...], 0)

    # Deep hidden layers: the SAME Linear(hidden, hidden) + ReLU applied
    # num_hidden_layers times.  Weight load and bias broadcast hoisted out of the loop.
    wh = wh_ref[...]
    bh = jnp.broadcast_to(bh_ref[...], (tb, hid_p))

    def hidden_layer(hh):
        z = jnp.dot(hh.astype(mm_dtype), wh,
                    preferred_element_type=jnp.float32, precision=precision)
        return jnp.maximum(z.astype(ew_dtype) + bh, 0)

    if num_hidden_layers <= 4:
        for _ in range(num_hidden_layers):          # small: inline unroll
            h = hidden_layer(h)
    else:
        # deep: bound Mosaic program size and vreg live ranges
        h = jax.lax.fori_loop(0, num_hidden_layers, lambda _, hh: hidden_layer(hh), h)

    # Output layer: Linear(hidden, 10 padded to 128 lanes), no activation, f32 store.
    out = jnp.dot(h.astype(mm_dtype), wo_ref[...],
                  preferred_element_type=jnp.float32, precision=precision)
    o_ref[...] = (out + bo_ref[...].astype(jnp.float32)).astype(o_ref.dtype)


# ---------------------------------------------------------------------------- wrapper --
class PreparedParams(NamedTuple):
    w1: jax.Array
    b1: jax.Array
    wh: jax.Array
    bh: jax.Array
    wo: jax.Array
    bo: jax.Array
    in_dim: int
    hid_p: int
    out_p: int
    out_dim: int


def prepare_params(params, *, matmul_dtype=jnp.bfloat16, elementwise_dtype=jnp.float32):
    """Pad (hidden/output dims to 128) and cast the model constants ONCE, outside the
    per-call path.  The input feature dim (K of layer 1) is intentionally NOT padded."""
    w1, b1, wh, bh, wo, bo = params
    in_dim, hid_dim = w1.shape
    out_dim = wo.shape[1]
    hid_p = _round_up(hid_dim, 128)
    out_p = _round_up(out_dim, 128)

    def pad_w(w, rows, cols):
        return jnp.pad(w, ((0, rows - w.shape[0]), (0, cols - w.shape[1])))

    def pad_b(b, cols):
        b2 = jnp.reshape(jnp.asarray(b), (1, -1))          # accepts (F,) or (1, F)
        return jnp.pad(b2, ((0, 0), (0, cols - b2.shape[1])))

    return PreparedParams(
        w1=pad_w(w1, in_dim, hid_p).astype(matmul_dtype),
        b1=pad_b(b1, hid_p).astype(elementwise_dtype),
        wh=pad_w(wh, hid_p, hid_p).astype(matmul_dtype),
        bh=pad_b(bh, hid_p).astype(elementwise_dtype),
        wo=pad_w(wo, hid_p, out_p).astype(matmul_dtype),
        bo=pad_b(bo, out_p).astype(elementwise_dtype),
        in_dim=in_dim, hid_p=hid_p, out_p=out_p, out_dim=out_dim)


def _vmem_ceiling_bytes():
    phys = 64 << 20                       # conservative default (v7x: 64 MiB per core)
    try:
        info = pltpu.get_tpu_info()
        for name in ("vmem_capacity_bytes", "vmem_size_bytes", "vmem_bytes"):
            val = getattr(info, name, None)
            if val:
                phys = int(val)
                break
    except Exception:
        pass
    return (phys * 3) // 4                # headroom for Mosaic-internal scratch


def _pick_batch_tile(batch, vmem_ceiling_bytes):
    # Small batch: one full-batch tile (block dim == full array dim is always legal).
    if batch <= 256:
        return batch
    # Generation-aware cap: ~64 MiB-VMEM chips (v7x) -> 512 rows; 128 MiB (v5e/v6e) -> 1024.
    cap = 1024 if vmem_ceiling_bytes > (56 << 20) else 512
    # Mid-size batches: at least 2 tiles so both v7x TensorCores get work on the
    # "parallel" axis; round to 256 rows for full MXU M-fill (also a multiple of 128/8).
    two_way = _round_up(pl.cdiv(batch, 2), 256)
    return min(cap, two_way)


def _vmem_limit_bytes(tb, in_dim, hid_p, out_p, mm_bytes, ew_bytes, ceiling):
    x_tile = tb * in_dim * 4
    o_tile = tb * out_p * 4
    weights = (in_dim * hid_p + hid_p * hid_p + hid_p * out_p) * mm_bytes
    biases = (2 * hid_p + out_p) * ew_bytes
    act = tb * hid_p * (4 + mm_bytes + ew_bytes)       # f32 dot result + casted copies
    # streams and resident operands are double-buffered by the Pallas pipeline
    needed = 2 * (x_tile + o_tile + weights + biases) + act
    return int(min(ceiling, max(2 * needed, 32 << 20)))


def default_dtypes():
    """bf16 MXU operands on every generation; bf16 elementwise only where the VPU has it."""
    ew = jnp.float32                       # safe / fastest on v5e and older (no bf16 VPU)
    try:
        kind = jax.devices()[0].device_kind.lower()
        if not any(t in kind for t in ("v2", "v3", "v4", "v5")):
            ew = jnp.bfloat16              # v6e / v7x: bf16 bias add + ReLU
    except Exception:
        pass
    return jnp.bfloat16, ew


def digit_classifier_forward(x, prep: PreparedParams, num_hidden_layers, *, precision=None):
    """Full MLP forward pass in one Pallas kernel.  x: (batch, in_dim) f32 (unpadded)."""
    batch, in_dim = x.shape
    assert in_dim == prep.in_dim, (in_dim, prep.in_dim)

    ceiling = _vmem_ceiling_bytes()
    tb = _pick_batch_tile(batch, ceiling)
    n_tiles = pl.cdiv(batch, tb)          # partial edge tile handled by Pallas masking

    mm_bytes = jnp.dtype(prep.w1.dtype).itemsize
    ew_bytes = jnp.dtype(prep.b1.dtype).itemsize

    flops = 2 * batch * (in_dim * prep.hid_p
                         + num_hidden_layers * prep.hid_p * prep.hid_p
                         + prep.hid_p * prep.out_p)
    bytes_accessed = (batch * in_dim * x.dtype.itemsize
                      + (prep.w1.size + prep.wh.size + prep.wo.size) * mm_bytes
                      + (prep.b1.size + prep.bh.size + prep.bo.size) * ew_bytes
                      + batch * prep.out_p * 4)
    cost = pl.CostEstimate(flops=flops, transcendentals=0, bytes_accessed=bytes_accessed)

    kernel = functools.partial(_mlp_kernel, num_hidden_layers, precision)

    def resident(a):                       # full-array block, constant index -> no re-DMA
        return pl.BlockSpec(a.shape, lambda i: (0, 0))

    out_padded = pl.pallas_call(
        kernel,
        out_shape=jax.ShapeDtypeStruct((batch, prep.out_p), jnp.float32),
        grid_spec=pl.GridSpec(
            grid=(n_tiles,),
            in_specs=[
                pl.BlockSpec((tb, in_dim), lambda i: (i, 0)),   # x streamed over batch
                resident(prep.w1), resident(prep.b1),
                resident(prep.wh), resident(prep.bh),
                resident(prep.wo), resident(prep.bo),
            ],
            out_specs=pl.BlockSpec((tb, prep.out_p), lambda i: (i, 0)),
        ),
        compiler_params=pltpu.CompilerParams(
            dimension_semantics=("parallel",),
            vmem_limit_bytes=_vmem_limit_bytes(
                tb, in_dim, prep.hid_p, prep.out_p, mm_bytes, ew_bytes, ceiling),
        ),
        cost_estimate=cost,
    )(x, prep.w1, prep.b1, prep.wh, prep.bh, prep.wo, prep.bo)

    # Only the lane padding of the 10-wide logits is sliced off (no batch padding).
    return out_padded[:, :prep.out_dim]


# -------------------------------------------------------------------------- reference --
def init_params(key, input_size, hidden_layers):
    """Deterministic init mimicking PyTorch's default Linear init (U[-1/sqrt(fan_in), +])."""
    k1, k2, k3, k4, k5, k6 = jax.random.split(key, 6)

    def linear(kw, kb, fan_in, fan_out):
        bound = 1.0 / jnp.sqrt(jnp.float32(fan_in))
        w = jax.random.uniform(kw, (fan_in, fan_out), jnp.float32, -bound, bound)
        b = jax.random.uniform(kb, (1, fan_out), jnp.float32, -bound, bound)
        return w, b

    w1, b1 = linear(k1, k2, input_size, hidden_layers)
    wh, bh = linear(k3, k4, hidden_layers, hidden_layers)   # shared across all deep layers
    wo, bo = linear(k5, k6, hidden_layers, 10)
    return w1, b1, wh, bh, wo, bo


def reference_forward(x, params, num_hidden_layers, precision=None):
    """Pure-JAX reference for correctness checking."""
    w1, b1, wh, bh, wo, bo = params
    h = jnp.maximum(jnp.dot(x, w1, precision=precision) + b1, 0.0)
    for _ in range(num_hidden_layers):
        h = jnp.maximum(jnp.dot(h, wh, precision=precision) + bh, 0.0)
    return jnp.dot(h, wo, precision=precision) + bo


# ------------------------------------------------------------------------------- main --
if __name__ == "__main__":
    batch = 8
    input_size = 64
    hidden_size = 32
    number_of_hidden_layers = 2

    key = jax.random.PRNGKey(0)
    kx, kp = jax.random.split(key)
    x = jax.random.normal(kx, (batch, input_size), jnp.float32)
    params = init_params(kp, input_size, hidden_size)

    ref = reference_forward(x, params, number_of_hidden_layers,
                            precision=jax.lax.Precision.HIGHEST)

    # 1) f32-operand path with HIGHEST precision in kernel AND reference (tight check).
    prep_f32 = prepare_params(params, matmul_dtype=jnp.float32,
                              elementwise_dtype=jnp.float32)
    out_f32 = jax.block_until_ready(
        digit_classifier_forward(x, prep_f32, number_of_hidden_layers,
                                 precision=jax.lax.Precision.HIGHEST))
    assert out_f32.shape == (batch, 10), out_f32.shape
    assert jnp.allclose(out_f32, ref, atol=1e-4, rtol=1e-4), "f32 mismatch vs reference"

    # 2) Fast path: bf16 MXU operands on every generation; bf16 elementwise on v6e/v7x,
    #    f32 elementwise on v5e and older (auto-detected).  Constants prepared once.
    mm_dtype, ew_dtype = default_dtypes()
    prep_fast = prepare_params(params, matmul_dtype=mm_dtype, elementwise_dtype=ew_dtype)
    out_fast = jax.block_until_ready(
        digit_classifier_forward(x, prep_fast, number_of_hidden_layers))
    assert out_fast.shape == (batch, 10), out_fast.shape
    assert jnp.allclose(out_fast, ref, atol=1e-1, rtol=1e-1), "bf16 mismatch vs reference"

    print("KERNEL_OK")
</pallas_src>

<mosaic_0001>
module attributes {stable_mosaic.version = 11 : i64} {
  func.func @_mlp_kernel(%arg0: i32, %arg1: memref<8x64xf32, #tpu.memory_space<vmem>>, %arg2: memref<64x128xf32, #tpu.memory_space<vmem>>, %arg3: memref<1x128xf32, #tpu.memory_space<vmem>>, %arg4: memref<128x128xf32, #tpu.memory_space<vmem>>, %arg5: memref<1x128xf32, #tpu.memory_space<vmem>>, %arg6: memref<128x128xf32, #tpu.memory_space<vmem>>, %arg7: memref<1x128xf32, #tpu.memory_space<vmem>>, %arg8: memref<8x128xf32, #tpu.memory_space<vmem>>) attributes {dimension_semantics = [#tpu.dimension_semantics<parallel>], iteration_bounds = array<i64: 1>, scalar_prefetch = 0 : i64, scratch_operands = 0 : i64, tpu.core_type = #tpu.core_type<tc>, window_params = [{transform_indices = @transform_0, window_bounds = array<i64: 8, 64>}, {pipeline_mode = #tpu.pipeline_mode<synchronous>, transform_indices = @transform_1, window_bounds = array<i64: 64, 128>}, {pipeline_mode = #tpu.pipeline_mode<synchronous>, transform_indices = @transform_2, window_bounds = array<i64: 1, 128>}, {pipeline_mode = #tpu.pipeline_mode<synchronous>, transform_indices = @transform_3, window_bounds = array<i64: 128, 128>}, {pipeline_mode = #tpu.pipeline_mode<synchronous>, transform_indices = @transform_4, window_bounds = array<i64: 1, 128>}, {pipeline_mode = #tpu.pipeline_mode<synchronous>, transform_indices = @transform_5, window_bounds = array<i64: 128, 128>}, {pipeline_mode = #tpu.pipeline_mode<synchronous>, transform_indices = @transform_6, window_bounds = array<i64: 1, 128>}, {transform_indices = @transform_7, window_bounds = array<i64: 8, 128>}]} {
    %c0 = arith.constant 0 : index
    %c0_0 = arith.constant 0 : index
    %0 = vector.load %arg1[%c0, %c0_0] : memref<8x64xf32, #tpu.memory_space<vmem>>, vector<8x64xf32>
    %c0_1 = arith.constant 0 : index
    %c0_2 = arith.constant 0 : index
    %1 = vector.load %arg2[%c0_1, %c0_2] : memref<64x128xf32, #tpu.memory_space<vmem>>, vector<64x128xf32>
    %cst = arith.constant dense<0.000000e+00> : vector<8x128xf32>
    %2 = tpu.matmul %0, %1, %cst {dimension_numbers = #tpu.dot_dimension_numbers<[1], [0], [0], [1], [0, 0, 1, 1], [], []>, precision = #tpu.contract_precision<fp32>} : vector<8x64xf32>, vector<64x128xf32>, vector<8x128xf32> -> vector<8x128xf32>
    %c0_3 = arith.constant 0 : index
    %c0_4 = arith.constant 0 : index
    %3 = vector.load %arg3[%c0_3, %c0_4] : memref<1x128xf32, #tpu.memory_space<vmem>>, vector<1x128xf32>
    %4 = vector.broadcast %3 : vector<1x128xf32> to vector<8x128xf32>
    %5 = arith.addf %2, %4 : vector<8x128xf32>
    %cst_5 = arith.constant 0.000000e+00 : f32
    %6 = vector.broadcast %cst_5 : f32 to vector<8x128xf32>
    %7 = arith.maximumf %5, %6 : vector<8x128xf32>
    %c0_6 = arith.constant 0 : index
    %c0_7 = arith.constant 0 : index
    %8 = vector.load %arg4[%c0_6, %c0_7] : memref<128x128xf32, #tpu.memory_space<vmem>>, vector<128x128xf32>
    %c0_8 = arith.constant 0 : index
    %c0_9 = arith.constant 0 : index
    %9 = vector.load %arg5[%c0_8, %c0_9] : memref<1x128xf32, #tpu.memory_space<vmem>>, vector<1x128xf32>
    %10 = vector.shape_cast %9 : vector<1x128xf32> to vector<1x128xf32>
    %11 = vector.broadcast %10 : vector<1x128xf32> to vector<8x128xf32>
    %cst_10 = arith.constant dense<0.000000e+00> : vector<8x128xf32>
    %12 = tpu.matmul %7, %8, %cst_10 {dimension_numbers = #tpu.dot_dimension_numbers<[1], [0], [0], [1], [0, 0, 1, 1], [], []>, precision = #tpu.contract_precision<fp32>} : vector<8x128xf32>, vector<128x128xf32>, vector<8x128xf32> -> vector<8x128xf32>
    %13 = arith.addf %12, %11 : vector<8x128xf32>
    %cst_11 = arith.constant 0.000000e+00 : f32
    %14 = vector.broadcast %cst_11 : f32 to vector<8x128xf32>
    %15 = arith.maximumf %13, %14 : vector<8x128xf32>
    %cst_12 = arith.constant dense<0.000000e+00> : vector<8x128xf32>
    %16 = tpu.matmul %15, %8, %cst_12 {dimension_numbers = #tpu.dot_dimension_numbers<[1], [0], [0], [1], [0, 0, 1, 1], [], []>, precision = #tpu.contract_precision<fp32>} : vector<8x128xf32>, vector<128x128xf32>, vector<8x128xf32> -> vector<8x128xf32>
    %17 = arith.addf %16, %11 : vector<8x128xf32>
    %cst_13 = arith.constant 0.000000e+00 : f32
    %18 = vector.broadcast %cst_13 : f32 to vector<8x128xf32>
    %19 = arith.maximumf %17, %18 : vector<8x128xf32>
    %c0_14 = arith.constant 0 : index
    %c0_15 = arith.constant 0 : index
    %20 = vector.load %arg6[%c0_14, %c0_15] : memref<128x128xf32, #tpu.memory_space<vmem>>, vector<128x128xf32>
    %cst_16 = arith.constant dense<0.000000e+00> : vector<8x128xf32>
    %21 = tpu.matmul %19, %20, %cst_16 {dimension_numbers = #tpu.dot_dimension_numbers<[1], [0], [0], [1], [0, 0, 1, 1], [], []>, precision = #tpu.contract_precision<fp32>} : vector<8x128xf32>, vector<128x128xf32>, vector<8x128xf32> -> vector<8x128xf32>
    %c0_17 = arith.constant 0 : index
    %c0_18 = arith.constant 0 : index
    %22 = vector.load %arg7[%c0_17, %c0_18] : memref<1x128xf32, #tpu.memory_space<vmem>>, vector<1x128xf32>
    %23 = vector.broadcast %22 : vector<1x128xf32> to vector<8x128xf32>
    %24 = arith.addf %21, %23 : vector<8x128xf32>
    %c0_19 = arith.constant 0 : index
    %c0_20 = arith.constant 0 : index
    %25 = vector.load %arg8[%c0_19, %c0_20] : memref<8x128xf32, #tpu.memory_space<vmem>>, vector<8x128xf32>
    tpu.vector_store %arg8[%c0_19, %c0_20], %24 {strides = array<i32>} : memref<8x128xf32, #tpu.memory_space<vmem>>, vector<8x128xf32>,
    return
  }
  func.func @transform_0(%arg0: i32) -> (i32, i32) {
    %c0_i32 = arith.constant 0 : i32
    %c0_i32_0 = arith.constant 0 : i32
    return %arg0, %c0_i32 : i32, i32
  }
  func.func @transform_1(%arg0: i32) -> (i32, i32) {
    %c0_i32 = arith.constant 0 : i32
    %c0_i32_0 = arith.constant 0 : i32
    %c0_i32_1 = arith.constant 0 : i32
    return %c0_i32, %c0_i32_0 : i32, i32
  }
  func.func @transform_2(%arg0: i32) -> (i32, i32) {
    %c0_i32 = arith.constant 0 : i32
    %c0_i32_0 = arith.constant 0 : i32
    %c0_i32_1 = arith.constant 0 : i32
    return %c0_i32, %c0_i32_0 : i32, i32
  }
  func.func @transform_3(%arg0: i32) -> (i32, i32) {
    %c0_i32 = arith.constant 0 : i32
    %c0_i32_0 = arith.constant 0 : i32
    %c0_i32_1 = arith.constant 0 : i32
    return %c0_i32, %c0_i32_0 : i32, i32
  }
  func.func @transform_4(%arg0: i32) -> (i32, i32) {
    %c0_i32 = arith.constant 0 : i32
    %c0_i32_0 = arith.constant 0 : i32
    %c0_i32_1 = arith.constant 0 : i32
    return %c0_i32, %c0_i32_0 : i32, i32
  }
  func.func @transform_5(%arg0: i32) -> (i32, i32) {
    %c0_i32 = arith.constant 0 : i32
    %c0_i32_0 = arith.constant 0 : i32
    %c0_i32_1 = arith.constant 0 : i32
    return %c0_i32, %c0_i32_0 : i32, i32
  }
  func.func @transform_6(%arg0: i32) -> (i32, i32) {
    %c0_i32 = arith.constant 0 : i32
    %c0_i32_0 = arith.constant 0 : i32
    %c0_i32_1 = arith.constant 0 : i32
    return %c0_i32, %c0_i32_0 : i32, i32
  }
  func.func @transform_7(%arg0: i32) -> (i32, i32) {
    %c0_i32 = arith.constant 0 : i32
    %c0_i32_0 = arith.constant 0 : i32
    return %arg0, %c0_i32 : i32, i32
  }
}

</mosaic_0001>

<llo_original>
// kernel: tpu_custom_call.1
$region0: #{tpu_custom_call.1}
  #allocation0 [shape = 'u32[]', space=smem, size = 0x4, offset = 0x4, fixed_abs, tag = 'smem constant byte address 0x4 - core index']
  #allocation1 [shape = 'u32[72,128]{1,0:T(1,128)}', space=vmem, size = 0x9000, scoped, tag = 'internal scratch']
  %s0 = inlined_call_operand.hbm [shape: f32[8,64], index: 0, kind: input, shape index: {}]
  %s1 = inlined_call_operand.hbm [shape: f32[64,128], index: 1, kind: input, shape index: {}]
  %s2 = inlined_call_operand.vmem [shape: f32[1,128], index: 2, kind: input, shape index: {}]
  %s3 = inlined_call_operand.hbm [shape: f32[128,128], index: 3, kind: input, shape index: {}]
  %s4 = inlined_call_operand.vmem [shape: f32[1,128], index: 4, kind: input, shape index: {}]
  %s5 = inlined_call_operand.hbm [shape: f32[128,128], index: 5, kind: input, shape index: {}]
  %s6 = inlined_call_operand.vmem [shape: f32[1,128], index: 6, kind: input, shape index: {}]
  %s7 = inlined_call_operand.hbm [shape: f32[8,128], index: 7, kind: output, shape index: {}]
  %s8 = sld [smem:[#allocation0]]
  $region54: #{tpu_custom_call.1} parent=0
    _
  %s10 = ssub.s32 1, %s8
  %s11 = scalar_select 0, %s10, %s8
  $region1: #{tpu_custom_call.1} parent=0
    #allocation2 [shape = 'u8[4096]{0}', space=vmem, size = 0x1000, scoped, tag = 'input window, operand 0, single buffered']
    #allocation3 [shape = 's32[1]{0}', space=sflag, size = 0x4, scoped, tag = 'scoped memory for tpu_custom_call.1']
    #allocation4 [shape = 's32[1]{0}', space=sflag, size = 0x4, scoped, tag = 'scoped memory for tpu_custom_call.1']
    #allocation5 [shape = 'u8[32768]{0}', space=vmem, size = 0x8000, scoped, tag = 'input window, operand 1, single buffered']
    #allocation6 [shape = 's32[1]{0}', space=sflag, size = 0x4, scoped, tag = 'scoped memory for tpu_custom_call.1']
    #allocation7 [shape = 'u8[65536]{0}', space=vmem, size = 0x10000, scoped, tag = 'input window, operand 3, single buffered']
    #allocation8 [shape = 'u8[65536]{0}', space=vmem, size = 0x10000, scoped, tag = 'input window, operand 5, single buffered']
    #allocation9 [shape = 's32[1]{0}', space=sflag, size = 0x4, scoped, tag = 'scoped memory for tpu_custom_call.1']
    #allocation10 [shape = 'u8[4096]{0}', space=vmem, size = 0x1000, scoped, tag = 'output window, operand 0, single buffered']
    %12 = vsyncpa [#allocation3], 0
    %13 = vsyncpa [#allocation6], 0
    %14 = vsyncpa [#allocation9], 0
    %15 = vsyncpa [#allocation4], 0
    // Predicated region
    $region2: #{tpu_custom_call.1} parent=1 // pred_check
      _
    $region3: #{tpu_custom_call.1} parent=1 // pred_check_branch
      %17 = sbr.rel (0) target = $region5
    $region4: #{tpu_custom_call.1} parent=1 // pred_region
      %19 = vsyncadd [#allocation3], 0
      %s21 = sshll.u32 %s0, 4
      %s22 = int_to_ptr.hbm [resolvable:$true] %s21
      %s23 = sshll.u32 [#allocation2], 4
      %s24 = int_to_ptr.vmem [resolvable:$true] %s23
      %26 = dma.hbm_to_vmem [thread:$0]  %s22, 128, %s24, [#allocation3]
    $region5: #{tpu_custom_call.1} parent=1 // pred_fallthru
      _
    // Predicated region
    $region6: #{tpu_custom_call.1} parent=1 // pred_check
      _
    $region7: #{tpu_custom_call.1} parent=1 // pred_check_branch
      %28 = sbr.rel (0) target = $region9
    $region8: #{tpu_custom_call.1} parent=1 // pred_region
      %30 = vsyncadd [#allocation6], 0
      %s31 = sshll.u32 %s1, 4
      %s32 = int_to_ptr.hbm [resolvable:$true] %s31
      %s33 = sshll.u32 [#allocation5], 4
      %s34 = int_to_ptr.vmem [resolvable:$true] %s33
      %39 = dma.hbm_to_vmem [thread:$0]  %s32, 1024, %s34, [#allocation6], 128, 128, 8
    $region9: #{tpu_custom_call.1} parent=1 // pred_fallthru
      _
    // Predicated region
    $region10: #{tpu_custom_call.1} parent=1 // pred_check
      _
    $region11: #{tpu_custom_call.1} parent=1 // pred_check_branch
      %41 = sbr.rel (0) target = $region13
    $region12: #{tpu_custom_call.1} parent=1 // pred_region
      _
    $region13: #{tpu_custom_call.1} parent=1 // pred_fallthru
      _
    // Predicated region
    $region14: #{tpu_custom_call.1} parent=1 // pred_check
      _
    $region15: #{tpu_custom_call.1} parent=1 // pred_check_branch
      %43 = sbr.rel (0) target = $region17
    $region16: #{tpu_custom_call.1} parent=1 // pred_region
      %45 = vsyncadd [#allocation6], 0
      %s46 = sshll.u32 %s3, 4
      %s47 = int_to_ptr.hbm [resolvable:$true] %s46
      %s48 = sshll.u32 [#allocation7], 4
      %s49 = int_to_ptr.vmem [resolvable:$true] %s48
      %54 = dma.hbm_to_vmem [thread:$0]  %s47, 2048, %s49, [#allocation6], 128, 128, 8
    $region17: #{tpu_custom_call.1} parent=1 // pred_fallthru
      _
    // Predicated region
    $region18: #{tpu_custom_call.1} parent=1 // pred_check
      _
    $region19: #{tpu_custom_call.1} parent=1 // pred_check_branch
      %56 = sbr.rel (0) target = $region21
    $region20: #{tpu_custom_call.1} parent=1 // pred_region
      _
    $region21: #{tpu_custom_call.1} parent=1 // pred_fallthru
      _
    // Predicated region
    $region22: #{tpu_custom_call.1} parent=1 // pred_check
      _
    $region23: #{tpu_custom_call.1} parent=1 // pred_check_branch
      %58 = sbr.rel (0) target = $region25
    $region24: #{tpu_custom_call.1} parent=1 // pred_region
      %60 = vsyncadd [#allocation9], 0
      %s61 = sshll.u32 %s5, 4
      %s62 = int_to_ptr.hbm [resolvable:$true] %s61
      %s63 = sshll.u32 [#allocation8], 4
      %s64 = int_to_ptr.vmem [resolvable:$true] %s63
      %69 = dma.hbm_to_vmem [thread:$0]  %s62, 2048, %s64, [#allocation9], 128, 128, 8
    $region25: #{tpu_custom_call.1} parent=1 // pred_fallthru
      _
    // Predicated region
    $region26: #{tpu_custom_call.1} parent=1 // pred_check
      _
    $region27: #{tpu_custom_call.1} parent=1 // pred_check_branch
      %71 = sbr.rel (0) target = $region29
    $region28: #{tpu_custom_call.1} parent=1 // pred_region
      _
    $region29: #{tpu_custom_call.1} parent=1 // pred_fallthru
      _
    // Predicated region
    $region30: #{tpu_custom_call.1} parent=1 // pred_check
      _
    $region31: #{tpu_custom_call.1} parent=1 // pred_check_branch
      %73 = sbr.rel (0) target = $region33
    $region32: #{tpu_custom_call.1} parent=1 // pred_region
      %75 = dma.done [#allocation3], 128
    $region33: #{tpu_custom_call.1} parent=1 // pred_fallthru
      _
    // Predicated region
    $region34: #{tpu_custom_call.1} parent=1 // pred_check
      _
    $region35: #{tpu_custom_call.1} parent=1 // pred_check_branch
      %77 = sbr.rel (0) target = $region37
    $region36: #{tpu_custom_call.1} parent=1 // pred_region
      %79 = dma.done [#allocation6], 1024
    $region37: #{tpu_custom_call.1} parent=1 // pred_fallthru
      _
    // Predicated region
    $region38: #{tpu_custom_call.1} parent=1 // pred_check
      _
    $region39: #{tpu_custom_call.1} parent=1 // pred_check_branch
      %81 = sbr.rel (0) target = $region41
    $region40: #{tpu_custom_call.1} parent=1 // pred_region
      %83 = dma.done [#allocation6], 2048
    $region41: #{tpu_custom_call.1} parent=1 // pred_fallthru
      _
    // Predicated region
    $region42: #{tpu_custom_call.1} parent=1 // pred_check
      _
    $region43: #{tpu_custom_call.1} parent=1 // pred_check_branch
      %85 = sbr.rel (0) target = $region45
    $region44: #{tpu_custom_call.1} parent=1 // pred_region
      %87 = dma.done [#allocation9], 2048
    $region45: #{tpu_custom_call.1} parent=1 // pred_fallthru
      _
    %v88 = vld [vmem:[#allocation2] sm:$0xff]
    %v89 = vld [vmem:[#allocation5] sm:$0xff]
    %v90 = vld [vmem:[#allocation5 + $0x8] sm:$0xff]
    %v91 = vld [vmem:[#allocation5 + $0x10] sm:$0xff]
    %v92 = vld [vmem:[#allocation5 + $0x18] sm:$0xff]
    %v93 = vld [vmem:[#allocation5 + $0x20] sm:$0xff]
    %v94 = vld [vmem:[#allocation5 + $0x28] sm:$0xff]
    %v95 = vld [vmem:[#allocation5 + $0x30] sm:$0xff]
    %v96 = vld [vmem:[#allocation5 + $0x38] sm:$0xff]
    %v97 = vld [vmem:[%s2] sm:$0x1]
    %v99 = vperm.slane %v97, 0
    %vm101 = vcmask 523264
    %v103 = vsel %vm101, %v88, 0
    %105 = vmatpush.msra.mxu0 0.0
    %106 = vmatpush.msra.mxu0 0.0
    %107 = vmatpush.msra.mxu0 0.0
    %108 = vmatpush.msra.mxu0 0.0
    %109 = vmatpush.msra.mxu0 0.0
    %110 = vmatpush.msra.mxu0 0.0
    %111 = vmatpush.msra.mxu0 0.0
    %112 = vmatpush.msra.mxu0 0.0
    %v113 = vand.u32 %v96, 4294901760
    %114 = vmatpush.msra.mxu0 %v113
    %v115 = vand.u32 %v95, 4294901760
    %116 = vmatpush.msra.mxu0 %v115
    %v117 = vand.u32 %v94, 4294901760
    %118 = vmatpush.msra.mxu0 %v117
    %v119 = vand.u32 %v93, 4294901760
    %120 = vmatpush.msra.mxu0 %v119
    %v121 = vand.u32 %v92, 4294901760
    %122 = vmatpush.msra.mxu0 %v121
    %v123 = vand.u32 %v91, 4294901760
    %124 = vmatpush.msra.mxu0 %v123
    %v125 = vand.u32 %v90, 4294901760
    %126 = vmatpush.msra.mxu0 %v125
    %v127 = vand.u32 %v89, 4294901760
    %128 = vmatpush.msra.mxu0 %v127
    %v129 = vand.u32 %v103, 4294901760
    %v130 = vsub.f32 %v103, %v129
    %v131 = vand.u32 %v130, 4294901760
    %v132 = vsub.f32 %v130, %v131
    %v133 = vand.u32 %v132, 4294901760
    %134 = vmatmul.f32.gmra.mxu0 %v133
    %v135 = vpop.f32.mrf.mxu0
    %v136 = vadd.f32 %v99, %v135
    %137 = vdwg.mxu0
    %138 = vmatpush.msra.mxu0 0.0
    %139 = vmatpush.msra.mxu0 0.0
    %140 = vmatpush.msra.mxu0 0.0
    %141 = vmatpush.msra.mxu0 0.0
    %142 = vmatpush.msra.mxu0 0.0
    %143 = vmatpush.msra.mxu0 0.0
    %144 = vmatpush.msra.mxu0 0.0
    %145 = vmatpush.msra.mxu0 0.0
    %v146 = vand.u32 %v96, 4294901760
    %v147 = vsub.f32 %v96, %v146
    %v148 = vand.u32 %v147, 4294901760
    %v149 = vsub.f32 %v147, %v148
    %v150 = vand.u32 %v149, 4294901760
    %151 = vmatpush.msra.mxu0 %v150
    %v152 = vand.u32 %v95, 4294901760
    %v153 = vsub.f32 %v95, %v152
    %v154 = vand.u32 %v153, 4294901760
    %v155 = vsub.f32 %v153, %v154
    %v156 = vand.u32 %v155, 4294901760
    %157 = vmatpush.msra.mxu0 %v156
    %v158 = vand.u32 %v94, 4294901760
    %v159 = vsub.f32 %v94, %v158
    %v160 = vand.u32 %v159, 4294901760
    %v161 = vsub.f32 %v159, %v160
    %v162 = vand.u32 %v161, 4294901760
    %163 = vmatpush.msra.mxu0 %v162
    %v164 = vand.u32 %v93, 4294901760
    %v165 = vsub.f32 %v93, %v164
    %v166 = vand.u32 %v165, 4294901760
    %v167 = vsub.f32 %v165, %v166
    %v168 = vand.u32 %v167, 4294901760
    %169 = vmatpush.msra.mxu0 %v168
    %v170 = vand.u32 %v92, 4294901760
    %v171 = vsub.f32 %v92, %v170
    %v172 = vand.u32 %v171, 4294901760
    %v173 = vsub.f32 %v171, %v172
    %v174 = vand.u32 %v173, 4294901760
    %175 = vmatpush.msra.mxu0 %v174
    %v176 = vand.u32 %v91, 4294901760
    %v177 = vsub.f32 %v91, %v176
    %v178 = vand.u32 %v177, 4294901760
    %v179 = vsub.f32 %v177, %v178
    %v180 = vand.u32 %v179, 4294901760
    %181 = vmatpush.msra.mxu0 %v180
    %v182 = vand.u32 %v90, 4294901760
    %v183 = vsub.f32 %v90, %v182
    %v184 = vand.u32 %v183, 4294901760
    %v185 = vsub.f32 %v183, %v184
    %v186 = vand.u32 %v185, 4294901760
    %187 = vmatpush.msra.mxu0 %v186
    %v188 = vand.u32 %v89, 4294901760
    %v189 = vsub.f32 %v89, %v188
    %v190 = vand.u32 %v189, 4294901760
    %v191 = vsub.f32 %v189, %v190
    %v192 = vand.u32 %v191, 4294901760
    %193 = vmatpush.msra.mxu0 %v192
    %v194 = vand.u32 %v103, 4294901760
    %195 = vmatmul.f32.gmra.mxu0 %v194
    %v196 = vpop.f32.mrf.mxu0
    %v197 = vadd.f32 %v136, %v196
    %198 = vdwg.mxu0
    %199 = vmatpush.msra.mxu0 0.0
    %200 = vmatpush.msra.mxu0 0.0
    %201 = vmatpush.msra.mxu0 0.0
    %202 = vmatpush.msra.mxu0 0.0
    %203 = vmatpush.msra.mxu0 0.0
    %204 = vmatpush.msra.mxu0 0.0
    %205 = vmatpush.msra.mxu0 0.0
    %206 = vmatpush.msra.mxu0 0.0
    %v207 = vand.u32 %v96, 4294901760
    %v208 = vsub.f32 %v96, %v207
    %209 = vmatpush.msra.mxu0 %v208
    %v210 = vand.u32 %v95, 4294901760
    %v211 = vsub.f32 %v95, %v210
    %212 = vmatpush.msra.mxu0 %v211
    %v213 = vand.u32 %v94, 4294901760
    %v214 = vsub.f32 %v94, %v213
    %215 = vmatpush.msra.mxu0 %v214
    %v216 = vand.u32 %v93, 4294901760
    %v217 = vsub.f32 %v93, %v216
    %218 = vmatpush.msra.mxu0 %v217
    %v219 = vand.u32 %v92, 4294901760
    %v220 = vsub.f32 %v92, %v219
    %221 = vmatpush.msra.mxu0 %v220
    %v222 = vand.u32 %v91, 4294901760
    %v223 = vsub.f32 %v91, %v222
    %224 = vmatpush.msra.mxu0 %v223
    %v225 = vand.u32 %v90, 4294901760
    %v226 = vsub.f32 %v90, %v225
    %227 = vmatpush.msra.mxu0 %v226
    %v228 = vand.u32 %v89, 4294901760
    %v229 = vsub.f32 %v89, %v228
    %230 = vmatpush.msra.mxu0 %v229
    %v231 = vand.u32 %v103, 4294901760
    %v232 = vsub.f32 %v103, %v231
    %233 = vmatmul.f32.gmra.mxu0 %v232
    %v234 = vpop.f32.mrf.mxu0
    %v235 = vadd.f32 %v197, %v234
    %236 = vdwg.mxu0
    %237 = vmatpush.msra.mxu0 0.0
    %238 = vmatpush.msra.mxu0 0.0
    %239 = vmatpush.msra.mxu0 0.0
    %240 = vmatpush.msra.mxu0 0.0
    %241 = vmatpush.msra.mxu0 0.0
    %242 = vmatpush.msra.mxu0 0.0
    %243 = vmatpush.msra.mxu0 0.0
    %244 = vmatpush.msra.mxu0 0.0
    %v245 = vand.u32 %v96, 4294901760
    %246 = vmatpush.msra.mxu0 %v245
    %v247 = vand.u32 %v95, 4294901760
    %248 = vmatpush.msra.mxu0 %v247
    %v249 = vand.u32 %v94, 4294901760
    %250 = vmatpush.msra.mxu0 %v249
    %v251 = vand.u32 %v93, 4294901760
    %252 = vmatpush.msra.mxu0 %v251
    %v253 = vand.u32 %v92, 4294901760
    %254 = vmatpush.msra.mxu0 %v253
    %v255 = vand.u32 %v91, 4294901760
    %256 = vmatpush.msra.mxu0 %v255
    %v257 = vand.u32 %v90, 4294901760
    %258 = vmatpush.msra.mxu0 %v257
    %v259 = vand.u32 %v89, 4294901760
    %260 = vmatpush.msra.mxu0 %v259
    %v261 = vand.u32 %v103, 4294901760
    %v262 = vsub.f32 %v103, %v261
    %v263 = vand.u32 %v262, 4294901760
    %264 = vmatmul.f32.gmra.mxu0 %v263
    %v265 = vpop.f32.mrf.mxu0
    %v266 = vadd.f32 %v235, %v265
    %267 = vdwg.mxu0
    %268 = vmatpush.msra.mxu0 0.0
    %269 = vmatpush.msra.mxu0 0.0
    %270 = vmatpush.msra.mxu0 0.0
    %271 = vmatpush.msra.mxu0 0.0
    %272 = vmatpush.msra.mxu0 0.0
    %273 = vmatpush.msra.mxu0 0.0
    %274 = vmatpush.msra.mxu0 0.0
    %275 = vmatpush.msra.mxu0 0.0
    %v276 = vand.u32 %v96, 4294901760
    %v277 = vsub.f32 %v96, %v276
    %v278 = vand.u32 %v277, 4294901760
    %279 = vmatpush.msra.mxu0 %v278
    %v280 = vand.u32 %v95, 4294901760
    %v281 = vsub.f32 %v95, %v280
    %v282 = vand.u32 %v281, 4294901760
    %283 = vmatpush.msra.mxu0 %v282
    %v284 = vand.u32 %v94, 4294901760
    %v285 = vsub.f32 %v94, %v284
    %v286 = vand.u32 %v285, 4294901760
    %287 = vmatpush.msra.mxu0 %v286
    %v288 = vand.u32 %v93, 4294901760
    %v289 = vsub.f32 %v93, %v288
    %v290 = vand.u32 %v289, 4294901760
    %291 = vmatpush.msra.mxu0 %v290
    %v292 = vand.u32 %v92, 4294901760
    %v293 = vsub.f32 %v92, %v292
    %v294 = vand.u32 %v293, 4294901760
    %295 = vmatpush.msra.mxu0 %v294
    %v296 = vand.u32 %v91, 4294901760
    %v297 = vsub.f32 %v91, %v296
    %v298 = vand.u32 %v297, 4294901760
    %299 = vmatpush.msra.mxu0 %v298
    %v300 = vand.u32 %v90, 4294901760
    %v301 = vsub.f32 %v90, %v300
    %v302 = vand.u32 %v301, 4294901760
    %303 = vmatpush.msra.mxu0 %v302
    %v304 = vand.u32 %v89, 4294901760
    %v305 = vsub.f32 %v89, %v304
    %v306 = vand.u32 %v305, 4294901760
    %307 = vmatpush.msra.mxu0 %v306
    %v308 = vand.u32 %v103, 4294901760
    %309 = vmatmul.f32.gmra.mxu0 %v308
    %v310 = vpop.f32.mrf.mxu0
    %v311 = vadd.f32 %v266, %v310
    %312 = vdwg.mxu0
    %313 = vmatpush.msra.mxu0 0.0
    %314 = vmatpush.msra.mxu0 0.0
    %315 = vmatpush.msra.mxu0 0.0
    %316 = vmatpush.msra.mxu0 0.0
    %317 = vmatpush.msra.mxu0 0.0
    %318 = vmatpush.msra.mxu0 0.0
    %319 = vmatpush.msra.mxu0 0.0
    %320 = vmatpush.msra.mxu0 0.0
    %v321 = vand.u32 %v96, 4294901760
    %322 = vmatpush.msra.mxu0 %v321
    %v323 = vand.u32 %v95, 4294901760
    %324 = vmatpush.msra.mxu0 %v323
    %v325 = vand.u32 %v94, 4294901760
    %326 = vmatpush.msra.mxu0 %v325
    %v327 = vand.u32 %v93, 4294901760
    %328 = vmatpush.msra.mxu0 %v327
    %v329 = vand.u32 %v92, 4294901760
    %330 = vmatpush.msra.mxu0 %v329
    %v331 = vand.u32 %v91, 4294901760
    %332 = vmatpush.msra.mxu0 %v331
    %v333 = vand.u32 %v90, 4294901760
    %334 = vmatpush.msra.mxu0 %v333
    %v335 = vand.u32 %v89, 4294901760
    %336 = vmatpush.msra.mxu0 %v335
    %v337 = vand.u32 %v103, 4294901760
    %338 = vmatmul.f32.gmra.mxu0 %v337
    %v339 = vpop.f32.mrf.mxu0
    %v340 = vadd.f32 %v311, %v339
    %341 = vdwg.mxu0
    %v342 = vmax.f32 %v340, 0.0
    %v343 = vld [vmem:[#allocation7] sm:$0xff]
    %v344 = vld [vmem:[#allocation7 + $0x8] sm:$0xff]
    %v345 = vld [vmem:[#allocation7 + $0x10] sm:$0xff]
    %v346 = vld [vmem:[#allocation7 + $0x18] sm:$0xff]
    %v347 = vld [vmem:[#allocation7 + $0x20] sm:$0xff]
    %v348 = vld [vmem:[#allocation7 + $0x28] sm:$0xff]
    %v349 = vld [vmem:[#allocation7 + $0x30] sm:$0xff]
    %v350 = vld [vmem:[#allocation7 + $0x38] sm:$0xff]
    %v351 = vld [vmem:[#allocation7 + $0x40] sm:$0xff]
    %v352 = vld [vmem:[#allocation7 + $0x48] sm:$0xff]
    %v353 = vld [vmem:[#allocation7 + $0x50] sm:$0xff]
    %v354 = vld [vmem:[#allocation7 + $0x58] sm:$0xff]
    %v355 = vld [vmem:[#allocation7 + $0x60] sm:$0xff]
    %v356 = vld [vmem:[#allocation7 + $0x68] sm:$0xff]
    %v357 = vld [vmem:[#allocation7 + $0x70] sm:$0xff]
    %v358 = vld [vmem:[#allocation7 + $0x78] sm:$0xff]
    %v359 = vld [vmem:[%s4] sm:$0x1]
    %v361 = vperm.slane %v359, 0
    %v363 = vand.u32 %v358, 4294901760
    %364 = vmatpush.msra.mxu0 %v363
    %v365 = vand.u32 %v357, 4294901760
    %366 = vmatpush.msra.mxu0 %v365
    %v367 = vand.u32 %v356, 4294901760
    %368 = vmatpush.msra.mxu0 %v367
    %v369 = vand.u32 %v355, 4294901760
    %370 = vmatpush.msra.mxu0 %v369
    %v371 = vand.u32 %v354, 4294901760
    %372 = vmatpush.msra.mxu0 %v371
    %v373 = vand.u32 %v353, 4294901760
    %374 = vmatpush.msra.mxu0 %v373
    %v375 = vand.u32 %v352, 4294901760
    %376 = vmatpush.msra.mxu0 %v375
    %v377 = vand.u32 %v351, 4294901760
    %378 = vmatpush.msra.mxu0 %v377
    %v379 = vand.u32 %v350, 4294901760
    %380 = vmatpush.msra.mxu0 %v379
    %v381 = vand.u32 %v349, 4294901760
    %382 = vmatpush.msra.mxu0 %v381
    %v383 = vand.u32 %v348, 4294901760
    %384 = vmatpush.msra.mxu0 %v383
    %v385 = vand.u32 %v347, 4294901760
    %386 = vmatpush.msra.mxu0 %v385
    %v387 = vand.u32 %v346, 4294901760
    %388 = vmatpush.msra.mxu0 %v387
    %v389 = vand.u32 %v345, 4294901760
    %390 = vmatpush.msra.mxu0 %v389
    %v391 = vand.u32 %v344, 4294901760
    %392 = vmatpush.msra.mxu0 %v391
    %v393 = vand.u32 %v343, 4294901760
    %394 = vmatpush.msra.mxu0 %v393
    %v395 = vand.u32 %v342, 4294901760
    %v396 = vsub.f32 %v342, %v395
    %v397 = vand.u32 %v396, 4294901760
    %v398 = vsub.f32 %v396, %v397
    %v399 = vand.u32 %v398, 4294901760
    %400 = vmatmul.f32.gmra.mxu0 %v399
    %v401 = vpop.f32.mrf.mxu0
    %v402 = vadd.f32 %v361, %v401
    %403 = vdwg.mxu0
    %v404 = vand.u32 %v358, 4294901760
    %v405 = vsub.f32 %v358, %v404
    %v406 = vand.u32 %v405, 4294901760
    %v407 = vsub.f32 %v405, %v406
    %v408 = vand.u32 %v407, 4294901760
    %409 = vmatpush.msra.mxu0 %v408
    %v410 = vand.u32 %v357, 4294901760
    %v411 = vsub.f32 %v357, %v410
    %v412 = vand.u32 %v411, 4294901760
    %v413 = vsub.f32 %v411, %v412
    %v414 = vand.u32 %v413, 4294901760
    %415 = vmatpush.msra.mxu0 %v414
    %v416 = vand.u32 %v356, 4294901760
    %v417 = vsub.f32 %v356, %v416
    %v418 = vand.u32 %v417, 4294901760
    %v419 = vsub.f32 %v417, %v418
    %v420 = vand.u32 %v419, 4294901760
    %421 = vmatpush.msra.mxu0 %v420
    %v422 = vand.u32 %v355, 4294901760
    %v423 = vsub.f32 %v355, %v422
    %v424 = vand.u32 %v423, 4294901760
    %v425 = vsub.f32 %v423, %v424
    %v426 = vand.u32 %v425, 4294901760
    %427 = vmatpush.msra.mxu0 %v426
    %v428 = vand.u32 %v354, 4294901760
    %v429 = vsub.f32 %v354, %v428
    %v430 = vand.u32 %v429, 4294901760
    %v431 = vsub.f32 %v429, %v430
    %v432 = vand.u32 %v431, 4294901760
    %433 = vmatpush.msra.mxu0 %v432
    %v434 = vand.u32 %v353, 4294901760
    %v435 = vsub.f32 %v353, %v434
    %v436 = vand.u32 %v435, 4294901760
    %v437 = vsub.f32 %v435, %v436
    %v438 = vand.u32 %v437, 4294901760
    %439 = vmatpush.msra.mxu0 %v438
    %v440 = vand.u32 %v352, 4294901760
    %v441 = vsub.f32 %v352, %v440
    %v442 = vand.u32 %v441, 4294901760
    %v443 = vsub.f32 %v441, %v442
    %v444 = vand.u32 %v443, 4294901760
    %445 = vmatpush.msra.mxu0 %v444
    %v446 = vand.u32 %v351, 4294901760
    %v447 = vsub.f32 %v351, %v446
    %v448 = vand.u32 %v447, 4294901760
    %v449 = vsub.f32 %v447, %v448
    %v450 = vand.u32 %v449, 4294901760
    %451 = vmatpush.msra.mxu0 %v450
    %v452 = vand.u32 %v350, 4294901760
    %v453 = vsub.f32 %v350, %v452
    %v454 = vand.u32 %v453, 4294901760
    %v455 = vsub.f32 %v453, %v454
    %v456 = vand.u32 %v455, 4294901760
    %457 = vmatpush.msra.mxu0 %v456
    %v458 = vand.u32 %v349, 4294901760
    %v459 = vsub.f32 %v349, %v458
    %v460 = vand.u32 %v459, 4294901760
    %v461 = vsub.f32 %v459, %v460
    %v462 = vand.u32 %v461, 4294901760
    %463 = vmatpush.msra.mxu0 %v462
    %v464 = vand.u32 %v348, 4294901760
    %v465 = vsub.f32 %v348, %v464
    %v466 = vand.u32 %v465, 4294901760
    %v467 = vsub.f32 %v465, %v466
    %v468 = vand.u32 %v467, 4294901760
    %469 = vmatpush.msra.mxu0 %v468
    %v470 = vand.u32 %v347, 4294901760
    %v471 = vsub.f32 %v347, %v470
    %v472 = vand.u32 %v471, 4294901760
    %v473 = vsub.f32 %v471, %v472
    %v474 = vand.u32 %v473, 4294901760
    %475 = vmatpush.msra.mxu0 %v474
    %v476 = vand.u32 %v346, 4294901760
    %v477 = vsub.f32 %v346, %v476
    %v478 = vand.u32 %v477, 4294901760
    %v479 = vsub.f32 %v477, %v478
    %v480 = vand.u32 %v479, 4294901760
    %481 = vmatpush.msra.mxu0 %v480
    %v482 = vand.u32 %v345, 4294901760
    %v483 = vsub.f32 %v345, %v482
    %v484 = vand.u32 %v483, 4294901760
    %v485 = vsub.f32 %v483, %v484
    %v486 = vand.u32 %v485, 4294901760
    %487 = vmatpush.msra.mxu0 %v486
    %v488 = vand.u32 %v344, 4294901760
    %v489 = vsub.f32 %v344, %v488
    %v490 = vand.u32 %v489, 4294901760
    %v491 = vsub.f32 %v489, %v490
    %v492 = vand.u32 %v491, 4294901760
    %493 = vmatpush.msra.mxu0 %v492
    %v494 = vand.u32 %v343, 4294901760
    %v495 = vsub.f32 %v343, %v494
    %v496 = vand.u32 %v495, 4294901760
    %v497 = vsub.f32 %v495, %v496
    %v498 = vand.u32 %v497, 4294901760
    %499 = vmatpush.msra.mxu0 %v498
    %v500 = vand.u32 %v342, 4294901760
    %501 = vmatmul.f32.gmra.mxu0 %v500
    %v502 = vpop.f32.mrf.mxu0
    %v503 = vadd.f32 %v402, %v502
    %504 = vdwg.mxu0
    %v505 = vand.u32 %v358, 4294901760
    %v506 = vsub.f32 %v358, %v505
    %507 = vmatpush.msra.mxu0 %v506
    %v508 = vand.u32 %v357, 4294901760
    %v509 = vsub.f32 %v357, %v508
    %510 = vmatpush.msra.mxu0 %v509
    %v511 = vand.u32 %v356, 4294901760
    %v512 = vsub.f32 %v356, %v511
    %513 = vmatpush.msra.mxu0 %v512
    %v514 = vand.u32 %v355, 4294901760
    %v515 = vsub.f32 %v355, %v514
    %516 = vmatpush.msra.mxu0 %v515
    %v517 = vand.u32 %v354, 4294901760
    %v518 = vsub.f32 %v354, %v517
    %519 = vmatpush.msra.mxu0 %v518
    %v520 = vand.u32 %v353, 4294901760
    %v521 = vsub.f32 %v353, %v520
    %522 = vmatpush.msra.mxu0 %v521
    %v523 = vand.u32 %v352, 4294901760
    %v524 = vsub.f32 %v352, %v523
    %525 = vmatpush.msra.mxu0 %v524
    %v526 = vand.u32 %v351, 4294901760
    %v527 = vsub.f32 %v351, %v526
    %528 = vmatpush.msra.mxu0 %v527
    %v529 = vand.u32 %v350, 4294901760
    %v530 = vsub.f32 %v350, %v529
    %531 = vmatpush.msra.mxu0 %v530
    %v532 = vand.u32 %v349, 4294901760
    %v533 = vsub.f32 %v349, %v532
    %534 = vmatpush.msra.mxu0 %v533
    %v535 = vand.u32 %v348, 4294901760
    %v536 = vsub.f32 %v348, %v535
    %537 = vmatpush.msra.mxu0 %v536
    %v538 = vand.u32 %v347, 4294901760
    %v539 = vsub.f32 %v347, %v538
    %540 = vmatpush.msra.mxu0 %v539
    %v541 = vand.u32 %v346, 4294901760
    %v542 = vsub.f32 %v346, %v541
    %543 = vmatpush.msra.mxu0 %v542
    %v544 = vand.u32 %v345, 4294901760
    %v545 = vsub.f32 %v345, %v544
    %546 = vmatpush.msra.mxu0 %v545
    %v547 = vand.u32 %v344, 4294901760
    %v548 = vsub.f32 %v344, %v547
    %549 = vmatpush.msra.mxu0 %v548
    %v550 = vand.u32 %v343, 4294901760
    %v551 = vsub.f32 %v343, %v550
    %552 = vmatpush.msra.mxu0 %v551
    %v553 = vand.u32 %v342, 4294901760
    %v554 = vsub.f32 %v342, %v553
    %555 = vmatmul.f32.gmra.mxu0 %v554
    %v556 = vpop.f32.mrf.mxu0
    %v557 = vadd.f32 %v503, %v556
    %558 = vdwg.mxu0
    %v559 = vand.u32 %v358, 4294901760
    %560 = vmatpush.msra.mxu0 %v559
    %v561 = vand.u32 %v357, 4294901760
    %562 = vmatpush.msra.mxu0 %v561
    %v563 = vand.u32 %v356, 4294901760
    %564 = vmatpush.msra.mxu0 %v563
    %v565 = vand.u32 %v355, 4294901760
    %566 = vmatpush.msra.mxu0 %v565
    %v567 = vand.u32 %v354, 4294901760
    %568 = vmatpush.msra.mxu0 %v567
    %v569 = vand.u32 %v353, 4294901760
    %570 = vmatpush.msra.mxu0 %v569
    %v571 = vand.u32 %v352, 4294901760
    %572 = vmatpush.msra.mxu0 %v571
    %v573 = vand.u32 %v351, 4294901760
    %574 = vmatpush.msra.mxu0 %v573
    %v575 = vand.u32 %v350, 4294901760
    %576 = vmatpush.msra.mxu0 %v575
    %v577 = vand.u32 %v349, 4294901760
    %578 = vmatpush.msra.mxu0 %v577
    %v579 = vand.u32 %v348, 4294901760
    %580 = vmatpush.msra.mxu0 %v579
    %v581 = vand.u32 %v347, 4294901760
    %582 = vmatpush.msra.mxu0 %v581
    %v583 = vand.u32 %v346, 4294901760
    %584 = vmatpush.msra.mxu0 %v583
    %v585 = vand.u32 %v345, 4294901760
    %586 = vmatpush.msra.mxu0 %v585
    %v587 = vand.u32 %v344, 4294901760
    %588 = vmatpush.msra.mxu0 %v587
    %v589 = vand.u32 %v343, 4294901760
    %590 = vmatpush.msra.mxu0 %v589
    %v591 = vand.u32 %v342, 4294901760
    %v592 = vsub.f32 %v342, %v591
    %v593 = vand.u32 %v592, 4294901760
    %594 = vmatmul.f32.gmra.mxu0 %v593
    %v595 = vpop.f32.mrf.mxu0
    %v596 = vadd.f32 %v557, %v595
    %597 = vdwg.mxu0
    %v598 = vand.u32 %v358, 4294901760
    %v599 = vsub.f32 %v358, %v598
    %v600 = vand.u32 %v599, 4294901760
    %601 = vmatpush.msra.mxu0 %v600
    %v602 = vand.u32 %v357, 4294901760
    %v603 = vsub.f32 %v357, %v602
    %v604 = vand.u32 %v603, 4294901760
    %605 = vmatpush.msra.mxu0 %v604
    %v606 = vand.u32 %v356, 4294901760
    %v607 = vsub.f32 %v356, %v606
    %v608 = vand.u32 %v607, 4294901760
    %609 = vmatpush.msra.mxu0 %v608
    %v610 = vand.u32 %v355, 4294901760
    %v611 = vsub.f32 %v355, %v610
    %v612 = vand.u32 %v611, 4294901760
    %613 = vmatpush.msra.mxu0 %v612
    %v614 = vand.u32 %v354, 4294901760
    %v615 = vsub.f32 %v354, %v614
    %v616 = vand.u32 %v615, 4294901760
    %617 = vmatpush.msra.mxu0 %v616
    %v618 = vand.u32 %v353, 4294901760
    %v619 = vsub.f32 %v353, %v618
    %v620 = vand.u32 %v619, 4294901760
    %621 = vmatpush.msra.mxu0 %v620
    %v622 = vand.u32 %v352, 4294901760
    %v623 = vsub.f32 %v352, %v622
    %v624 = vand.u32 %v623, 4294901760
    %625 = vmatpush.msra.mxu0 %v624
    %v626 = vand.u32 %v351, 4294901760
    %v627 = vsub.f32 %v351, %v626
    %v628 = vand.u32 %v627, 4294901760
    %629 = vmatpush.msra.mxu0 %v628
    %v630 = vand.u32 %v350, 4294901760
    %v631 = vsub.f32 %v350, %v630
    %v632 = vand.u32 %v631, 4294901760
    %633 = vmatpush.msra.mxu0 %v632
    %v634 = vand.u32 %v349, 4294901760
    %v635 = vsub.f32 %v349, %v634
    %v636 = vand.u32 %v635, 4294901760
    %637 = vmatpush.msra.mxu0 %v636
    %v638 = vand.u32 %v348, 4294901760
    %v639 = vsub.f32 %v348, %v638
    %v640 = vand.u32 %v639, 4294901760
    %641 = vmatpush.msra.mxu0 %v640
    %v642 = vand.u32 %v347, 4294901760
    %v643 = vsub.f32 %v347, %v642
    %v644 = vand.u32 %v643, 4294901760
    %645 = vmatpush.msra.mxu0 %v644
    %v646 = vand.u32 %v346, 4294901760
    %v647 = vsub.f32 %v346, %v646
    %v648 = vand.u32 %v647, 4294901760
    %649 = vmatpush.msra.mxu0 %v648
    %v650 = vand.u32 %v345, 4294901760
    %v651 = vsub.f32 %v345, %v650
    %v652 = vand.u32 %v651, 4294901760
    %653 = vmatpush.msra.mxu0 %v652
    %v654 = vand.u32 %v344, 4294901760
    %v655 = vsub.f32 %v344, %v654
    %v656 = vand.u32 %v655, 4294901760
    %657 = vmatpush.msra.mxu0 %v656
    %v658 = vand.u32 %v343, 4294901760
    %v659 = vsub.f32 %v343, %v658
    %v660 = vand.u32 %v659, 4294901760
    %661 = vmatpush.msra.mxu0 %v660
    %v662 = vand.u32 %v342, 4294901760
    %663 = vmatmul.f32.gmra.mxu0 %v662
    %v664 = vpop.f32.mrf.mxu0
    %v665 = vadd.f32 %v596, %v664
    %666 = vdwg.mxu0
    %v667 = vand.u32 %v358, 4294901760
    %668 = vmatpush.msra.mxu0 %v667
    %v669 = vand.u32 %v357, 4294901760
    %670 = vmatpush.msra.mxu0 %v669
    %v671 = vand.u32 %v356, 4294901760
    %672 = vmatpush.msra.mxu0 %v671
    %v673 = vand.u32 %v355, 4294901760
    %674 = vmatpush.msra.mxu0 %v673
    %v675 = vand.u32 %v354, 4294901760
    %676 = vmatpush.msra.mxu0 %v675
    %v677 = vand.u32 %v353, 4294901760
    %678 = vmatpush.msra.mxu0 %v677
    %v679 = vand.u32 %v352, 4294901760
    %680 = vmatpush.msra.mxu0 %v679
    %v681 = vand.u32 %v351, 4294901760
    %682 = vmatpush.msra.mxu0 %v681
    %v683 = vand.u32 %v350, 4294901760
    %684 = vmatpush.msra.mxu0 %v683
    %v685 = vand.u32 %v349, 4294901760
    %686 = vmatpush.msra.mxu0 %v685
    %v687 = vand.u32 %v348, 4294901760
    %688 = vmatpush.msra.mxu0 %v687
    %v689 = vand.u32 %v347, 4294901760
    %690 = vmatpush.msra.mxu0 %v689
    %v691 = vand.u32 %v346, 4294901760
    %692 = vmatpush.msra.mxu0 %v691
    %v693 = vand.u32 %v345, 4294901760
    %694 = vmatpush.msra.mxu0 %v693
    %v695 = vand.u32 %v344, 4294901760
    %696 = vmatpush.msra.mxu0 %v695
    %v697 = vand.u32 %v343, 4294901760
    %698 = vmatpush.msra.mxu0 %v697
    %v699 = vand.u32 %v342, 4294901760
    %700 = vmatmul.f32.gmra.mxu0 %v699
    %v701 = vpop.f32.mrf.mxu0
    %v702 = vadd.f32 %v665, %v701
    %703 = vdwg.mxu0
    %v704 = vmax.f32 %v702, 0.0
    %v705 = vand.u32 %v358, 4294901760
    %706 = vmatpush.msra.mxu0 %v705
    %v707 = vand.u32 %v357, 4294901760
    %708 = vmatpush.msra.mxu0 %v707
    %v709 = vand.u32 %v356, 4294901760
    %710 = vmatpush.msra.mxu0 %v709
    %v711 = vand.u32 %v355, 4294901760
    %712 = vmatpush.msra.mxu0 %v711
    %v713 = vand.u32 %v354, 4294901760
    %714 = vmatpush.msra.mxu0 %v713
    %v715 = vand.u32 %v353, 4294901760
    %716 = vmatpush.msra.mxu0 %v715
    %v717 = vand.u32 %v352, 4294901760
    %718 = vmatpush.msra.mxu0 %v717
    %v719 = vand.u32 %v351, 4294901760
    %720 = vmatpush.msra.mxu0 %v719
    %v721 = vand.u32 %v350, 4294901760
    %722 = vmatpush.msra.mxu0 %v721
    %v723 = vand.u32 %v349, 4294901760
    %724 = vmatpush.msra.mxu0 %v723
    %v725 = vand.u32 %v348, 4294901760
    %726 = vmatpush.msra.mxu0 %v725
    %v727 = vand.u32 %v347, 4294901760
    %728 = vmatpush.msra.mxu0 %v727
    %v729 = vand.u32 %v346, 4294901760
    %730 = vmatpush.msra.mxu0 %v729
    %v731 = vand.u32 %v345, 4294901760
    %732 = vmatpush.msra.mxu0 %v731
    %v733 = vand.u32 %v344, 4294901760
    %734 = vmatpush.msra.mxu0 %v733
    %v735 = vand.u32 %v343, 4294901760
    %736 = vmatpush.msra.mxu0 %v735
    %v737 = vand.u32 %v704, 4294901760
    %v738 = vsub.f32 %v704, %v737
    %v739 = vand.u32 %v738, 4294901760
    %v740 = vsub.f32 %v738, %v739
    %v741 = vand.u32 %v740, 4294901760
    %742 = vmatmul.f32.gmra.mxu0 %v741
    %v743 = vpop.f32.mrf.mxu0
    %v744 = vadd.f32 %v361, %v743
    %745 = vdwg.mxu0
    %v746 = vand.u32 %v358, 4294901760
    %v747 = vsub.f32 %v358, %v746
    %v748 = vand.u32 %v747, 4294901760
    %v749 = vsub.f32 %v747, %v748
    %v750 = vand.u32 %v749, 4294901760
    %751 = vmatpush.msra.mxu0 %v750
    %v752 = vand.u32 %v357, 4294901760
    %v753 = vsub.f32 %v357, %v752
    %v754 = vand.u32 %v753, 4294901760
    %v755 = vsub.f32 %v753, %v754
    %v756 = vand.u32 %v755, 4294901760
    %757 = vmatpush.msra.mxu0 %v756
    %v758 = vand.u32 %v356, 4294901760
    %v759 = vsub.f32 %v356, %v758
    %v760 = vand.u32 %v759, 4294901760
    %v761 = vsub.f32 %v759, %v760
    %v762 = vand.u32 %v761, 4294901760
    %763 = vmatpush.msra.mxu0 %v762
    %v764 = vand.u32 %v355, 4294901760
    %v765 = vsub.f32 %v355, %v764
    %v766 = vand.u32 %v765, 4294901760
    %v767 = vsub.f32 %v765, %v766
    %v768 = vand.u32 %v767, 4294901760
    %769 = vmatpush.msra.mxu0 %v768
    %v770 = vand.u32 %v354, 4294901760
    %v771 = vsub.f32 %v354, %v770
    %v772 = vand.u32 %v771, 4294901760
    %v773 = vsub.f32 %v771, %v772
    %v774 = vand.u32 %v773, 4294901760
    %775 = vmatpush.msra.mxu0 %v774
    %v776 = vand.u32 %v353, 4294901760
    %v777 = vsub.f32 %v353, %v776
    %v778 = vand.u32 %v777, 4294901760
    %v779 = vsub.f32 %v777, %v778
    %v780 = vand.u32 %v779, 4294901760
    %781 = vmatpush.msra.mxu0 %v780
    %v782 = vand.u32 %v352, 4294901760
    %v783 = vsub.f32 %v352, %v782
    %v784 = vand.u32 %v783, 4294901760
    %v785 = vsub.f32 %v783, %v784
    %v786 = vand.u32 %v785, 4294901760
    %787 = vmatpush.msra.mxu0 %v786
    %v788 = vand.u32 %v351, 4294901760
    %v789 = vsub.f32 %v351, %v788
    %v790 = vand.u32 %v789, 4294901760
    %v791 = vsub.f32 %v789, %v790
    %v792 = vand.u32 %v791, 4294901760
    %793 = vmatpush.msra.mxu0 %v792
    %v794 = vand.u32 %v350, 4294901760
    %v795 = vsub.f32 %v350, %v794
    %v796 = vand.u32 %v795, 4294901760
    %v797 = vsub.f32 %v795, %v796
    %v798 = vand.u32 %v797, 4294901760
    %799 = vmatpush.msra.mxu0 %v798
    %v800 = vand.u32 %v349, 4294901760
    %v801 = vsub.f32 %v349, %v800
    %v802 = vand.u32 %v801, 4294901760
    %v803 = vsub.f32 %v801, %v802
    %v804 = vand.u32 %v803, 4294901760
    %805 = vmatpush.msra.mxu0 %v804
    %v806 = vand.u32 %v348, 4294901760
    %v807 = vsub.f32 %v348, %v806
    %v808 = vand.u32 %v807, 4294901760
    %v809 = vsub.f32 %v807, %v808
    %v810 = vand.u32 %v809, 4294901760
    %811 = vmatpush.msra.mxu0 %v810
    %v812 = vand.u32 %v347, 4294901760
    %v813 = vsub.f32 %v347, %v812
    %v814 = vand.u32 %v813, 4294901760
    %v815 = vsub.f32 %v813, %v814
    %v816 = vand.u32 %v815, 4294901760
    %817 = vmatpush.msra.mxu0 %v816
    %v818 = vand.u32 %v346, 4294901760
    %v819 = vsub.f32 %v346, %v818
    %v820 = vand.u32 %v819, 4294901760
    %v821 = vsub.f32 %v819, %v820
    %v822 = vand.u32 %v821, 4294901760
    %823 = vmatpush.msra.mxu0 %v822
    %v824 = vand.u32 %v345, 4294901760
    %v825 = vsub.f32 %v345, %v824
    %v826 = vand.u32 %v825, 4294901760
    %v827 = vsub.f32 %v825, %v826
    %v828 = vand.u32 %v827, 4294901760
    %829 = vmatpush.msra.mxu0 %v828
    %v830 = vand.u32 %v344, 4294901760
    %v831 = vsub.f32 %v344, %v830
    %v832 = vand.u32 %v831, 4294901760
    %v833 = vsub.f32 %v831, %v832
    %v834 = vand.u32 %v833, 4294901760
    %835 = vmatpush.msra.mxu0 %v834
    %v836 = vand.u32 %v343, 4294901760
    %v837 = vsub.f32 %v343, %v836
    %v838 = vand.u32 %v837, 4294901760
    %v839 = vsub.f32 %v837, %v838
    %v840 = vand.u32 %v839, 4294901760
    %841 = vmatpush.msra.mxu0 %v840
    %v842 = vand.u32 %v704, 4294901760
    %843 = vmatmul.f32.gmra.mxu0 %v842
    %v844 = vpop.f32.mrf.mxu0
    %v845 = vadd.f32 %v744, %v844
    %846 = vdwg.mxu0
    %v847 = vand.u32 %v358, 4294901760
    %v848 = vsub.f32 %v358, %v847
    %849 = vmatpush.msra.mxu0 %v848
    %v850 = vand.u32 %v357, 4294901760
    %v851 = vsub.f32 %v357, %v850
    %852 = vmatpush.msra.mxu0 %v851
    %v853 = vand.u32 %v356, 4294901760
    %v854 = vsub.f32 %v356, %v853
    %855 = vmatpush.msra.mxu0 %v854
    %v856 = vand.u32 %v355, 4294901760
    %v857 = vsub.f32 %v355, %v856
    %858 = vmatpush.msra.mxu0 %v857
    %v859 = vand.u32 %v354, 4294901760
    %v860 = vsub.f32 %v354, %v859
    %861 = vmatpush.msra.mxu0 %v860
    %v862 = vand.u32 %v353, 4294901760
    %v863 = vsub.f32 %v353, %v862
    %864 = vmatpush.msra.mxu0 %v863
    %v865 = vand.u32 %v352, 4294901760
    %v866 = vsub.f32 %v352, %v865
    %867 = vmatpush.msra.mxu0 %v866
    %v868 = vand.u32 %v351, 4294901760
    %v869 = vsub.f32 %v351, %v868
    %870 = vmatpush.msra.mxu0 %v869
    %v871 = vand.u32 %v350, 4294901760
    %v872 = vsub.f32 %v350, %v871
    %873 = vmatpush.msra.mxu0 %v872
    %v874 = vand.u32 %v349, 4294901760
    %v875 = vsub.f32 %v349, %v874
    %876 = vmatpush.msra.mxu0 %v875
    %v877 = vand.u32 %v348, 4294901760
    %v878 = vsub.f32 %v348, %v877
    %879 = vmatpush.msra.mxu0 %v878
    %v880 = vand.u32 %v347, 4294901760
    %v881 = vsub.f32 %v347, %v880
    %882 = vmatpush.msra.mxu0 %v881
    %v883 = vand.u32 %v346, 4294901760
    %v884 = vsub.f32 %v346, %v883
    %885 = vmatpush.msra.mxu0 %v884
    %v886 = vand.u32 %v345, 4294901760
    %v887 = vsub.f32 %v345, %v886
    %888 = vmatpush.msra.mxu0 %v887
    %v889 = vand.u32 %v344, 4294901760
    %v890 = vsub.f32 %v344, %v889
    %891 = vmatpush.msra.mxu0 %v890
    %v892 = vand.u32 %v343, 4294901760
    %v893 = vsub.f32 %v343, %v892
    %894 = vmatpush.msra.mxu0 %v893
    %v895 = vand.u32 %v704, 4294901760
    %v896 = vsub.f32 %v704, %v895
    %897 = vmatmul.f32.gmra.mxu0 %v896
    %v898 = vpop.f32.mrf.mxu0
    %v899 = vadd.f32 %v845, %v898
    %900 = vdwg.mxu0
    %v901 = vand.u32 %v358, 4294901760
    %902 = vmatpush.msra.mxu0 %v901
    %v903 = vand.u32 %v357, 4294901760
    %904 = vmatpush.msra.mxu0 %v903
    %v905 = vand.u32 %v356, 4294901760
    %906 = vmatpush.msra.mxu0 %v905
    %v907 = vand.u32 %v355, 4294901760
    %908 = vmatpush.msra.mxu0 %v907
    %v909 = vand.u32 %v354, 4294901760
    %910 = vmatpush.msra.mxu0 %v909
    %v911 = vand.u32 %v353, 4294901760
    %912 = vmatpush.msra.mxu0 %v911
    %v913 = vand.u32 %v352, 4294901760
    %914 = vmatpush.msra.mxu0 %v913
    %v915 = vand.u32 %v351, 4294901760
    %916 = vmatpush.msra.mxu0 %v915
    %v917 = vand.u32 %v350, 4294901760
    %918 = vmatpush.msra.mxu0 %v917
    %v919 = vand.u32 %v349, 4294901760
    %920 = vmatpush.msra.mxu0 %v919
    %v921 = vand.u32 %v348, 4294901760
    %922 = vmatpush.msra.mxu0 %v921
    %v923 = vand.u32 %v347, 4294901760
    %924 = vmatpush.msra.mxu0 %v923
    %v925 = vand.u32 %v346, 4294901760
    %926 = vmatpush.msra.mxu0 %v925
    %v927 = vand.u32 %v345, 4294901760
    %928 = vmatpush.msra.mxu0 %v927
    %v929 = vand.u32 %v344, 4294901760
    %930 = vmatpush.msra.mxu0 %v929
    %v931 = vand.u32 %v343, 4294901760
    %932 = vmatpush.msra.mxu0 %v931
    %v933 = vand.u32 %v704, 4294901760
    %v934 = vsub.f32 %v704, %v933
    %v935 = vand.u32 %v934, 4294901760
    %936 = vmatmul.f32.gmra.mxu0 %v935
    %v937 = vpop.f32.mrf.mxu0
    %v938 = vadd.f32 %v899, %v937
    %939 = vdwg.mxu0
    %v940 = vand.u32 %v358, 4294901760
    %v941 = vsub.f32 %v358, %v940
    %v942 = vand.u32 %v941, 4294901760
    %943 = vmatpush.msra.mxu0 %v942
    %v944 = vand.u32 %v357, 4294901760
    %v945 = vsub.f32 %v357, %v944
    %v946 = vand.u32 %v945, 4294901760
    %947 = vmatpush.msra.mxu0 %v946
    %v948 = vand.u32 %v356, 4294901760
    %v949 = vsub.f32 %v356, %v948
    %v950 = vand.u32 %v949, 4294901760
    %951 = vmatpush.msra.mxu0 %v950
    %v952 = vand.u32 %v355, 4294901760
    %v953 = vsub.f32 %v355, %v952
    %v954 = vand.u32 %v953, 4294901760
    %955 = vmatpush.msra.mxu0 %v954
    %v956 = vand.u32 %v354, 4294901760
    %v957 = vsub.f32 %v354, %v956
    %v958 = vand.u32 %v957, 4294901760
    %959 = vmatpush.msra.mxu0 %v958
    %v960 = vand.u32 %v353, 4294901760
    %v961 = vsub.f32 %v353, %v960
    %v962 = vand.u32 %v961, 4294901760
    %963 = vmatpush.msra.mxu0 %v962
    %v964 = vand.u32 %v352, 4294901760
    %v965 = vsub.f32 %v352, %v964
    %v966 = vand.u32 %v965, 4294901760
    %967 = vmatpush.msra.mxu0 %v966
    %v968 = vand.u32 %v351, 4294901760
    %v969 = vsub.f32 %v351, %v968
    %v970 = vand.u32 %v969, 4294901760
    %971 = vmatpush.msra.mxu0 %v970
    %v972 = vand.u32 %v350, 4294901760
    %v973 = vsub.f32 %v350, %v972
    %v974 = vand.u32 %v973, 4294901760
    %975 = vmatpush.msra.mxu0 %v974
    %v976 = vand.u32 %v349, 4294901760
    %v977 = vsub.f32 %v349, %v976
    %v978 = vand.u32 %v977, 4294901760
    %979 = vmatpush.msra.mxu0 %v978
    %v980 = vand.u32 %v348, 4294901760
    %v981 = vsub.f32 %v348, %v980
    %v982 = vand.u32 %v981, 4294901760
    %983 = vmatpush.msra.mxu0 %v982
    %v984 = vand.u32 %v347, 4294901760
    %v985 = vsub.f32 %v347, %v984
    %v986 = vand.u32 %v985, 4294901760
    %987 = vmatpush.msra.mxu0 %v986
    %v988 = vand.u32 %v346, 4294901760
    %v989 = vsub.f32 %v346, %v988
    %v990 = vand.u32 %v989, 4294901760
    %991 = vmatpush.msra.mxu0 %v990
    %v992 = vand.u32 %v345, 4294901760
    %v993 = vsub.f32 %v345, %v992
    %v994 = vand.u32 %v993, 4294901760
    %995 = vmatpush.msra.mxu0 %v994
    %v996 = vand.u32 %v344, 4294901760
    %v997 = vsub.f32 %v344, %v996
    %v998 = vand.u32 %v997, 4294901760
    %999 = vmatpush.msra.mxu0 %v998
    %v1000 = vand.u32 %v343, 4294901760
    %v1001 = vsub.f32 %v343, %v1000
    %v1002 = vand.u32 %v1001, 4294901760
    %1003 = vmatpush.msra.mxu0 %v1002
    %v1004 = vand.u32 %v704, 4294901760
    %1005 = vmatmul.f32.gmra.mxu0 %v1004
    %v1006 = vpop.f32.mrf.mxu0
    %v1007 = vadd.f32 %v938, %v1006
    %1008 = vdwg.mxu0
    %v1009 = vand.u32 %v358, 4294901760
    %1010 = vmatpush.msra.mxu0 %v1009
    %v1011 = vand.u32 %v357, 4294901760
    %1012 = vmatpush.msra.mxu0 %v1011
    %v1013 = vand.u32 %v356, 4294901760
    %1014 = vmatpush.msra.mxu0 %v1013
    %v1015 = vand.u32 %v355, 4294901760
    %1016 = vmatpush.msra.mxu0 %v1015
    %v1017 = vand.u32 %v354, 4294901760
    %1018 = vmatpush.msra.mxu0 %v1017
    %v1019 = vand.u32 %v353, 4294901760
    %1020 = vmatpush.msra.mxu0 %v1019
    %v1021 = vand.u32 %v352, 4294901760
    %1022 = vmatpush.msra.mxu0 %v1021
    %v1023 = vand.u32 %v351, 4294901760
    %1024 = vmatpush.msra.mxu0 %v1023
    %v1025 = vand.u32 %v350, 4294901760
    %1026 = vmatpush.msra.mxu0 %v1025
    %v1027 = vand.u32 %v349, 4294901760
    %1028 = vmatpush.msra.mxu0 %v1027
    %v1029 = vand.u32 %v348, 4294901760
    %1030 = vmatpush.msra.mxu0 %v1029
    %v1031 = vand.u32 %v347, 4294901760
    %1032 = vmatpush.msra.mxu0 %v1031
    %v1033 = vand.u32 %v346, 4294901760
    %1034 = vmatpush.msra.mxu0 %v1033
    %v1035 = vand.u32 %v345, 4294901760
    %1036 = vmatpush.msra.mxu0 %v1035
    %v1037 = vand.u32 %v344, 4294901760
    %1038 = vmatpush.msra.mxu0 %v1037
    %v1039 = vand.u32 %v343, 4294901760
    %1040 = vmatpush.msra.mxu0 %v1039
    %v1041 = vand.u32 %v704, 4294901760
    %1042 = vmatmul.f32.gmra.mxu0 %v1041
    %v1043 = vpop.f32.mrf.mxu0
    %v1044 = vadd.f32 %v1007, %v1043
    %1045 = vdwg.mxu0
    %v1046 = vmax.f32 %v1044, 0.0
    %v1047 = vld [vmem:[#allocation8] sm:$0xff]
    %v1048 = vld [vmem:[#allocation8 + $0x8] sm:$0xff]
    %v1049 = vld [vmem:[#allocation8 + $0x10] sm:$0xff]
    %v1050 = vld [vmem:[#allocation8 + $0x18] sm:$0xff]
    %v1051 = vld [vmem:[#allocation8 + $0x20] sm:$0xff]
    %v1052 = vld [vmem:[#allocation8 + $0x28] sm:$0xff]
    %v1053 = vld [vmem:[#allocation8 + $0x30] sm:$0xff]
    %v1054 = vld [vmem:[#allocation8 + $0x38] sm:$0xff]
    %v1055 = vld [vmem:[#allocation8 + $0x40] sm:$0xff]
    %v1056 = vld [vmem:[#allocation8 + $0x48] sm:$0xff]
    %v1057 = vld [vmem:[#allocation8 + $0x50] sm:$0xff]
    %v1058 = vld [vmem:[#allocation8 + $0x58] sm:$0xff]
    %v1059 = vld [vmem:[#allocation8 + $0x60] sm:$0xff]
    %v1060 = vld [vmem:[#allocation8 + $0x68] sm:$0xff]
    %v1061 = vld [vmem:[#allocation8 + $0x70] sm:$0xff]
    %v1062 = vld [vmem:[#allocation8 + $0x78] sm:$0xff]
    %v1063 = vld [vmem:[%s6] sm:$0x1]
    %v1065 = vperm.slane %v1063, 0
    %v1067 = vand.u32 %v1062, 4294901760
    %1068 = vmatpush.msra.mxu0 %v1067
    %v1069 = vand.u32 %v1061, 4294901760
    %1070 = vmatpush.msra.mxu0 %v1069
    %v1071 = vand.u32 %v1060, 4294901760
    %1072 = vmatpush.msra.mxu0 %v1071
    %v1073 = vand.u32 %v1059, 4294901760
    %1074 = vmatpush.msra.mxu0 %v1073
    %v1075 = vand.u32 %v1058, 4294901760
    %1076 = vmatpush.msra.mxu0 %v1075
    %v1077 = vand.u32 %v1057, 4294901760
    %1078 = vmatpush.msra.mxu0 %v1077
    %v1079 = vand.u32 %v1056, 4294901760
    %1080 = vmatpush.msra.mxu0 %v1079
    %v1081 = vand.u32 %v1055, 4294901760
    %1082 = vmatpush.msra.mxu0 %v1081
    %v1083 = vand.u32 %v1054, 4294901760
    %1084 = vmatpush.msra.mxu0 %v1083
    %v1085 = vand.u32 %v1053, 4294901760
    %1086 = vmatpush.msra.mxu0 %v1085
    %v1087 = vand.u32 %v1052, 4294901760
    %1088 = vmatpush.msra.mxu0 %v1087
    %v1089 = vand.u32 %v1051, 4294901760
    %1090 = vmatpush.msra.mxu0 %v1089
    %v1091 = vand.u32 %v1050, 4294901760
    %1092 = vmatpush.msra.mxu0 %v1091
    %v1093 = vand.u32 %v1049, 4294901760
    %1094 = vmatpush.msra.mxu0 %v1093
    %v1095 = vand.u32 %v1048, 4294901760
    %1096 = vmatpush.msra.mxu0 %v1095
    %v1097 = vand.u32 %v1047, 4294901760
    %1098 = vmatpush.msra.mxu0 %v1097
    %v1099 = vand.u32 %v1046, 4294901760
    %v1100 = vsub.f32 %v1046, %v1099
    %v1101 = vand.u32 %v1100, 4294901760
    %v1102 = vsub.f32 %v1100, %v1101
    %v1103 = vand.u32 %v1102, 4294901760
    %1104 = vmatmul.f32.gmra.mxu0 %v1103
    %v1105 = vpop.f32.mrf.mxu0
    %v1106 = vadd.f32 %v1065, %v1105
    %1107 = vdwg.mxu0
    %v1108 = vand.u32 %v1062, 4294901760
    %v1109 = vsub.f32 %v1062, %v1108
    %v1110 = vand.u32 %v1109, 4294901760
    %v1111 = vsub.f32 %v1109, %v1110
    %v1112 = vand.u32 %v1111, 4294901760
    %1113 = vmatpush.msra.mxu0 %v1112
    %v1114 = vand.u32 %v1061, 4294901760
    %v1115 = vsub.f32 %v1061, %v1114
    %v1116 = vand.u32 %v1115, 4294901760
    %v1117 = vsub.f32 %v1115, %v1116
    %v1118 = vand.u32 %v1117, 4294901760
    %1119 = vmatpush.msra.mxu0 %v1118
    %v1120 = vand.u32 %v1060, 4294901760
    %v1121 = vsub.f32 %v1060, %v1120
    %v1122 = vand.u32 %v1121, 4294901760
    %v1123 = vsub.f32 %v1121, %v1122
    %v1124 = vand.u32 %v1123, 4294901760
    %1125 = vmatpush.msra.mxu0 %v1124
    %v1126 = vand.u32 %v1059, 4294901760
    %v1127 = vsub.f32 %v1059, %v1126
    %v1128 = vand.u32 %v1127, 4294901760
    %v1129 = vsub.f32 %v1127, %v1128
    %v1130 = vand.u32 %v1129, 4294901760
    %1131 = vmatpush.msra.mxu0 %v1130
    %v1132 = vand.u32 %v1058, 4294901760
    %v1133 = vsub.f32 %v1058, %v1132
    %v1134 = vand.u32 %v1133, 4294901760
    %v1135 = vsub.f32 %v1133, %v1134
    %v1136 = vand.u32 %v1135, 4294901760
    %1137 = vmatpush.msra.mxu0 %v1136
    %v1138 = vand.u32 %v1057, 4294901760
    %v1139 = vsub.f32 %v1057, %v1138
    %v1140 = vand.u32 %v1139, 4294901760
    %v1141 = vsub.f32 %v1139, %v1140
    %v1142 = vand.u32 %v1141, 4294901760
    %1143 = vmatpush.msra.mxu0 %v1142
    %v1144 = vand.u32 %v1056, 4294901760
    %v1145 = vsub.f32 %v1056, %v1144
    %v1146 = vand.u32 %v1145, 4294901760
    %v1147 = vsub.f32 %v1145, %v1146
    %v1148 = vand.u32 %v1147, 4294901760
    %1149 = vmatpush.msra.mxu0 %v1148
    %v1150 = vand.u32 %v1055, 4294901760
    %v1151 = vsub.f32 %v1055, %v1150
    %v1152 = vand.u32 %v1151, 4294901760
    %v1153 = vsub.f32 %v1151, %v1152
    %v1154 = vand.u32 %v1153, 4294901760
    %1155 = vmatpush.msra.mxu0 %v1154
    %v1156 = vand.u32 %v1054, 4294901760
    %v1157 = vsub.f32 %v1054, %v1156
    %v1158 = vand.u32 %v1157, 4294901760
    %v1159 = vsub.f32 %v1157, %v1158
    %v1160 = vand.u32 %v1159, 4294901760
    %1161 = vmatpush.msra.mxu0 %v1160
    %v1162 = vand.u32 %v1053, 4294901760
    %v1163 = vsub.f32 %v1053, %v1162
    %v1164 = vand.u32 %v1163, 4294901760
    %v1165 = vsub.f32 %v1163, %v1164
    %v1166 = vand.u32 %v1165, 4294901760
    %1167 = vmatpush.msra.mxu0 %v1166
    %v1168 = vand.u32 %v1052, 4294901760
    %v1169 = vsub.f32 %v1052, %v1168
    %v1170 = vand.u32 %v1169, 4294901760
    %v1171 = vsub.f32 %v1169, %v1170
    %v1172 = vand.u32 %v1171, 4294901760
    %1173 = vmatpush.msra.mxu0 %v1172
    %v1174 = vand.u32 %v1051, 4294901760
    %v1175 = vsub.f32 %v1051, %v1174
    %v1176 = vand.u32 %v1175, 4294901760
    %v1177 = vsub.f32 %v1175, %v1176
    %v1178 = vand.u32 %v1177, 4294901760
    %1179 = vmatpush.msra.mxu0 %v1178
    %v1180 = vand.u32 %v1050, 4294901760
    %v1181 = vsub.f32 %v1050, %v1180
    %v1182 = vand.u32 %v1181, 4294901760
    %v1183 = vsub.f32 %v1181, %v1182
    %v1184 = vand.u32 %v1183, 4294901760
    %1185 = vmatpush.msra.mxu0 %v1184
    %v1186 = vand.u32 %v1049, 4294901760
    %v1187 = vsub.f32 %v1049, %v1186
    %v1188 = vand.u32 %v1187, 4294901760
    %v1189 = vsub.f32 %v1187, %v1188
    %v1190 = vand.u32 %v1189, 4294901760
    %1191 = vmatpush.msra.mxu0 %v1190
    %v1192 = vand.u32 %v1048, 4294901760
    %v1193 = vsub.f32 %v1048, %v1192
    %v1194 = vand.u32 %v1193, 4294901760
    %v1195 = vsub.f32 %v1193, %v1194
    %v1196 = vand.u32 %v1195, 4294901760
    %1197 = vmatpush.msra.mxu0 %v1196
    %v1198 = vand.u32 %v1047, 4294901760
    %v1199 = vsub.f32 %v1047, %v1198
    %v1200 = vand.u32 %v1199, 4294901760
    %v1201 = vsub.f32 %v1199, %v1200
    %v1202 = vand.u32 %v1201, 4294901760
    %1203 = vmatpush.msra.mxu0 %v1202
    %v1204 = vand.u32 %v1046, 4294901760
    %1205 = vmatmul.f32.gmra.mxu0 %v1204
    %v1206 = vpop.f32.mrf.mxu0
    %v1207 = vadd.f32 %v1106, %v1206
    %1208 = vdwg.mxu0
    %v1209 = vand.u32 %v1062, 4294901760
    %v1210 = vsub.f32 %v1062, %v1209
    %1211 = vmatpush.msra.mxu0 %v1210
    %v1212 = vand.u32 %v1061, 4294901760
    %v1213 = vsub.f32 %v1061, %v1212
    %1214 = vmatpush.msra.mxu0 %v1213
    %v1215 = vand.u32 %v1060, 4294901760
    %v1216 = vsub.f32 %v1060, %v1215
    %1217 = vmatpush.msra.mxu0 %v1216
    %v1218 = vand.u32 %v1059, 4294901760
    %v1219 = vsub.f32 %v1059, %v1218
    %1220 = vmatpush.msra.mxu0 %v1219
    %v1221 = vand.u32 %v1058, 4294901760
    %v1222 = vsub.f32 %v1058, %v1221
    %1223 = vmatpush.msra.mxu0 %v1222
    %v1224 = vand.u32 %v1057, 4294901760
    %v1225 = vsub.f32 %v1057, %v1224
    %1226 = vmatpush.msra.mxu0 %v1225
    %v1227 = vand.u32 %v1056, 4294901760
    %v1228 = vsub.f32 %v1056, %v1227
    %1229 = vmatpush.msra.mxu0 %v1228
    %v1230 = vand.u32 %v1055, 4294901760
    %v1231 = vsub.f32 %v1055, %v1230
    %1232 = vmatpush.msra.mxu0 %v1231
    %v1233 = vand.u32 %v1054, 4294901760
    %v1234 = vsub.f32 %v1054, %v1233
    %1235 = vmatpush.msra.mxu0 %v1234
    %v1236 = vand.u32 %v1053, 4294901760
    %v1237 = vsub.f32 %v1053, %v1236
    %1238 = vmatpush.msra.mxu0 %v1237
    %v1239 = vand.u32 %v1052, 4294901760
    %v1240 = vsub.f32 %v1052, %v1239
    %1241 = vmatpush.msra.mxu0 %v1240
    %v1242 = vand.u32 %v1051, 4294901760
    %v1243 = vsub.f32 %v1051, %v1242
    %1244 = vmatpush.msra.mxu0 %v1243
    %v1245 = vand.u32 %v1050, 4294901760
    %v1246 = vsub.f32 %v1050, %v1245
    %1247 = vmatpush.msra.mxu0 %v1246
    %v1248 = vand.u32 %v1049, 4294901760
    %v1249 = vsub.f32 %v1049, %v1248
    %1250 = vmatpush.msra.mxu0 %v1249
    %v1251 = vand.u32 %v1048, 4294901760
    %v1252 = vsub.f32 %v1048, %v1251
    %1253 = vmatpush.msra.mxu0 %v1252
    %v1254 = vand.u32 %v1047, 4294901760
    %v1255 = vsub.f32 %v1047, %v1254
    %1256 = vmatpush.msra.mxu0 %v1255
    %v1257 = vand.u32 %v1046, 4294901760
    %v1258 = vsub.f32 %v1046, %v1257
    %1259 = vmatmul.f32.gmra.mxu0 %v1258
    %v1260 = vpop.f32.mrf.mxu0
    %v1261 = vadd.f32 %v1207, %v1260
    %1262 = vdwg.mxu0
    %v1263 = vand.u32 %v1062, 4294901760
    %1264 = vmatpush.msra.mxu0 %v1263
    %v1265 = vand.u32 %v1061, 4294901760
    %1266 = vmatpush.msra.mxu0 %v1265
    %v1267 = vand.u32 %v1060, 4294901760
    %1268 = vmatpush.msra.mxu0 %v1267
    %v1269 = vand.u32 %v1059, 4294901760
    %1270 = vmatpush.msra.mxu0 %v1269
    %v1271 = vand.u32 %v1058, 4294901760
    %1272 = vmatpush.msra.mxu0 %v1271
    %v1273 = vand.u32 %v1057, 4294901760
    %1274 = vmatpush.msra.mxu0 %v1273
    %v1275 = vand.u32 %v1056, 4294901760
    %1276 = vmatpush.msra.mxu0 %v1275
    %v1277 = vand.u32 %v1055, 4294901760
    %1278 = vmatpush.msra.mxu0 %v1277
    %v1279 = vand.u32 %v1054, 4294901760
    %1280 = vmatpush.msra.mxu0 %v1279
    %v1281 = vand.u32 %v1053, 4294901760
    %1282 = vmatpush.msra.mxu0 %v1281
    %v1283 = vand.u32 %v1052, 4294901760
    %1284 = vmatpush.msra.mxu0 %v1283
    %v1285 = vand.u32 %v1051, 4294901760
    %1286 = vmatpush.msra.mxu0 %v1285
    %v1287 = vand.u32 %v1050, 4294901760
    %1288 = vmatpush.msra.mxu0 %v1287
    %v1289 = vand.u32 %v1049, 4294901760
    %1290 = vmatpush.msra.mxu0 %v1289
    %v1291 = vand.u32 %v1048, 4294901760
    %1292 = vmatpush.msra.mxu0 %v1291
    %v1293 = vand.u32 %v1047, 4294901760
    %1294 = vmatpush.msra.mxu0 %v1293
    %v1295 = vand.u32 %v1046, 4294901760
    %v1296 = vsub.f32 %v1046, %v1295
    %v1297 = vand.u32 %v1296, 4294901760
    %1298 = vmatmul.f32.gmra.mxu0 %v1297
    %v1299 = vpop.f32.mrf.mxu0
    %v1300 = vadd.f32 %v1261, %v1299
    %1301 = vdwg.mxu0
    %v1302 = vand.u32 %v1062, 4294901760
    %v1303 = vsub.f32 %v1062, %v1302
    %v1304 = vand.u32 %v1303, 4294901760
    %1305 = vmatpush.msra.mxu0 %v1304
    %v1306 = vand.u32 %v1061, 4294901760
    %v1307 = vsub.f32 %v1061, %v1306
    %v1308 = vand.u32 %v1307, 4294901760
    %1309 = vmatpush.msra.mxu0 %v1308
    %v1310 = vand.u32 %v1060, 4294901760
    %v1311 = vsub.f32 %v1060, %v1310
    %v1312 = vand.u32 %v1311, 4294901760
    %1313 = vmatpush.msra.mxu0 %v1312
    %v1314 = vand.u32 %v1059, 4294901760
    %v1315 = vsub.f32 %v1059, %v1314
    %v1316 = vand.u32 %v1315, 4294901760
    %1317 = vmatpush.msra.mxu0 %v1316
    %v1318 = vand.u32 %v1058, 4294901760
    %v1319 = vsub.f32 %v1058, %v1318
    %v1320 = vand.u32 %v1319, 4294901760
    %1321 = vmatpush.msra.mxu0 %v1320
    %v1322 = vand.u32 %v1057, 4294901760
    %v1323 = vsub.f32 %v1057, %v1322
    %v1324 = vand.u32 %v1323, 4294901760
    %1325 = vmatpush.msra.mxu0 %v1324
    %v1326 = vand.u32 %v1056, 4294901760
    %v1327 = vsub.f32 %v1056, %v1326
    %v1328 = vand.u32 %v1327, 4294901760
    %1329 = vmatpush.msra.mxu0 %v1328
    %v1330 = vand.u32 %v1055, 4294901760
    %v1331 = vsub.f32 %v1055, %v1330
    %v1332 = vand.u32 %v1331, 4294901760
    %1333 = vmatpush.msra.mxu0 %v1332
    %v1334 = vand.u32 %v1054, 4294901760
    %v1335 = vsub.f32 %v1054, %v1334
    %v1336 = vand.u32 %v1335, 4294901760
    %1337 = vmatpush.msra.mxu0 %v1336
    %v1338 = vand.u32 %v1053, 4294901760
    %v1339 = vsub.f32 %v1053, %v1338
    %v1340 = vand.u32 %v1339, 4294901760
    %1341 = vmatpush.msra.mxu0 %v1340
    %v1342 = vand.u32 %v1052, 4294901760
    %v1343 = vsub.f32 %v1052, %v1342
    %v1344 = vand.u32 %v1343, 4294901760
    %1345 = vmatpush.msra.mxu0 %v1344
    %v1346 = vand.u32 %v1051, 4294901760
    %v1347 = vsub.f32 %v1051, %v1346
    %v1348 = vand.u32 %v1347, 4294901760
    %1349 = vmatpush.msra.mxu0 %v1348
    %v1350 = vand.u32 %v1050, 4294901760
    %v1351 = vsub.f32 %v1050, %v1350
    %v1352 = vand.u32 %v1351, 4294901760
    %1353 = vmatpush.msra.mxu0 %v1352
    %v1354 = vand.u32 %v1049, 4294901760
    %v1355 = vsub.f32 %v1049, %v1354
    %v1356 = vand.u32 %v1355, 4294901760
    %1357 = vmatpush.msra.mxu0 %v1356
    %v1358 = vand.u32 %v1048, 4294901760
    %v1359 = vsub.f32 %v1048, %v1358
    %v1360 = vand.u32 %v1359, 4294901760
    %1361 = vmatpush.msra.mxu0 %v1360
    %v1362 = vand.u32 %v1047, 4294901760
    %v1363 = vsub.f32 %v1047, %v1362
    %v1364 = vand.u32 %v1363, 4294901760
    %1365 = vmatpush.msra.mxu0 %v1364
    %v1366 = vand.u32 %v1046, 4294901760
    %1367 = vmatmul.f32.gmra.mxu0 %v1366
    %v1368 = vpop.f32.mrf.mxu0
    %v1369 = vadd.f32 %v1300, %v1368
    %1370 = vdwg.mxu0
    %v1371 = vand.u32 %v1062, 4294901760
    %1372 = vmatpush.msra.mxu0 %v1371
    %v1373 = vand.u32 %v1061, 4294901760
    %1374 = vmatpush.msra.mxu0 %v1373
    %v1375 = vand.u32 %v1060, 4294901760
    %1376 = vmatpush.msra.mxu0 %v1375
    %v1377 = vand.u32 %v1059, 4294901760
    %1378 = vmatpush.msra.mxu0 %v1377
    %v1379 = vand.u32 %v1058, 4294901760
    %1380 = vmatpush.msra.mxu0 %v1379
    %v1381 = vand.u32 %v1057, 4294901760
    %1382 = vmatpush.msra.mxu0 %v1381
    %v1383 = vand.u32 %v1056, 4294901760
    %1384 = vmatpush.msra.mxu0 %v1383
    %v1385 = vand.u32 %v1055, 4294901760
    %1386 = vmatpush.msra.mxu0 %v1385
    %v1387 = vand.u32 %v1054, 4294901760
    %1388 = vmatpush.msra.mxu0 %v1387
    %v1389 = vand.u32 %v1053, 4294901760
    %1390 = vmatpush.msra.mxu0 %v1389
    %v1391 = vand.u32 %v1052, 4294901760
    %1392 = vmatpush.msra.mxu0 %v1391
    %v1393 = vand.u32 %v1051, 4294901760
    %1394 = vmatpush.msra.mxu0 %v1393
    %v1395 = vand.u32 %v1050, 4294901760
    %1396 = vmatpush.msra.mxu0 %v1395
    %v1397 = vand.u32 %v1049, 4294901760
    %1398 = vmatpush.msra.mxu0 %v1397
    %v1399 = vand.u32 %v1048, 4294901760
    %1400 = vmatpush.msra.mxu0 %v1399
    %v1401 = vand.u32 %v1047, 4294901760
    %1402 = vmatpush.msra.mxu0 %v1401
    %v1403 = vand.u32 %v1046, 4294901760
    %1404 = vmatmul.f32.gmra.mxu0 %v1403
    %v1405 = vpop.f32.mrf.mxu0
    %v1406 = vadd.f32 %v1369, %v1405
    %1407 = vdwg.mxu0
    %1408 = vst [vmem:[#allocation10] sm:$0xff] %v1406
    // Predicated region
    $region46: #{tpu_custom_call.1} parent=1 // pred_check
      _
    $region47: #{tpu_custom_call.1} parent=1 // pred_check_branch
      %1410 = sbr.rel (0) target = $region49
    $region48: #{tpu_custom_call.1} parent=1 // pred_region
      %1412 = vsyncadd [#allocation4], 0
      %s1414 = sshll.u32 [#allocation10], 4
      %s1415 = int_to_ptr.vmem [resolvable:$true] %s1414
      %s1416 = sshll.u32 %s7, 4
      %s1417 = int_to_ptr.hbm [resolvable:$true] %s1416
      %1419 = dma.vmem_to_hbm [thread:$0]  %s1415, 128, %s1417, [#allocation4]
    $region49: #{tpu_custom_call.1} parent=1 // pred_fallthru
      _
    // Predicated region
    $region50: #{tpu_custom_call.1} parent=1 // pred_check
      _
    $region51: #{tpu_custom_call.1} parent=1 // pred_check_branch
      %1421 = sbr.rel (0) target = $region53
    $region52: #{tpu_custom_call.1} parent=1 // pred_region
      %1423 = dma.done [#allocation4], 128
    $region53: #{tpu_custom_call.1} parent=1 // pred_fallthru
      _
    %1424 = vsyncpa [#allocation3], 1
    %1425 = vsyncpa [#allocation6], 1
    %1426 = vsyncpa [#allocation9], 1
    %1427 = vsyncpa [#allocation4], 1

</llo_original>
